<compile_context>
chip_gen: v6e
topology: v6e:2x2x1
jax: 0.10.0
libtpu: 0.0.40
codegen_flags: <defaults>
</compile_context>

<pallas_src>
import functools

import jax
import jax.numpy as jnp
from jax.experimental import pallas as pl
from jax.experimental.pallas import tpu as pltpu

BN_EPS = 1e-5        # nn.BatchNorm1d default
L2_EPS = 1e-12       # F.normalize default


def _geu_reasoning_kernel(x_ref, m_ref, wt_ref, b_ref, g1_ref, be1_ref,
                          g2_ref, be2_ref, o_ref, acc_ref, aff_ref, *, inv_n):
    p = pl.program_id(0)           # phase: 0 = accumulate BN stats, 1 = apply
    i = pl.program_id(1)           # batch tile
    nb = pl.num_programs(1)

    # Linear: x @ W^T + b (W pre-transposed in the wrapper -> row-major matmul).
    # Recomputed in both phases: cheaper than round-tripping x2 through HBM and
    # keeps the kernel a single pallas_call.
    x2 = (jnp.dot(x_ref[...], wt_ref[...], preferred_element_type=jnp.float32)
          + b_ref[...])

    @pl.when(jnp.logical_and(p == 0, i == 0))
    def _init():
        acc_ref[...] = jnp.zeros_like(acc_ref)

    @pl.when(p == 0)
    def _accumulate():
        m = m_ref[...].astype(jnp.float32)
        # Single-pass BN statistics: per-feature sum and sum-of-squares.
        acc_ref[0:1, :] += jnp.sum(m, axis=0, keepdims=True)
        acc_ref[1:2, :] += jnp.sum(m * m, axis=0, keepdims=True)
        acc_ref[2:3, :] += jnp.sum(x2, axis=0, keepdims=True)
        acc_ref[3:4, :] += jnp.sum(x2 * x2, axis=0, keepdims=True)
        # Keep the phase-0 output flush deterministic (fully overwritten in
        # phase 1).
        o_ref[...] = x2.astype(o_ref.dtype)

    @pl.when(jnp.logical_and(p == 0, i == nb - 1))
    def _finalize():
        # Fold each BatchNorm into a per-feature affine: BN(v) = v * a + c.
        mean_m = acc_ref[0:1, :] * inv_n
        var_m = acc_ref[1:2, :] * inv_n - mean_m * mean_m
        mean_x = acc_ref[2:3, :] * inv_n
        var_x = acc_ref[3:4, :] * inv_n - mean_x * mean_x
        a1 = jax.lax.rsqrt(var_m + BN_EPS) * g1_ref[...]
        a2 = jax.lax.rsqrt(var_x + BN_EPS) * g2_ref[...]
        aff_ref[0:1, :] = a1
        aff_ref[1:2, :] = be1_ref[...] - mean_m * a1
        aff_ref[2:3, :] = a2
        aff_ref[3:4, :] = be2_ref[...] - mean_x * a2

    @pl.when(p == 1)
    def _apply():
        x = x_ref[...].astype(jnp.float32)     # elementwise path stays f32
        m = m_ref[...].astype(jnp.float32)
        t = (m * aff_ref[0:1, :] + aff_ref[1:2, :]
             + x2 * aff_ref[2:3, :] + aff_ref[3:4, :])
        # GLU(cat(x, t), dim=1) == x * sigmoid(t)
        y = x * jax.nn.sigmoid(t)
        # F.normalize: row-wise L2 with eps clamp via a single EUP rsqrt.
        sumsq = jnp.sum(y * y, axis=1, keepdims=True)
        y = y * jax.lax.rsqrt(jnp.maximum(sumsq, L2_EPS * L2_EPS))
        o_ref[...] = y.astype(o_ref.dtype)


@functools.partial(jax.jit, static_argnames=("matmul_dtype",))
def gated_embedding_unit_reasoning(x, mask, w, b, gamma1, beta1, gamma2, beta2,
                                   matmul_dtype=None):
    """x, mask: (B, D); w: (D, D) (PyTorch Linear layout); rest: (D,)."""
    B, D = x.shape
    assert mask.shape == (B, D)
    assert w.shape == (D, D)

    # Batch tile: largest power-of-two tile <= 512 that divides B.  512 rows of
    # f32 at D up to a few thousand keeps the double-buffered x/mask/out tiles
    # well inside v7x's 64 MiB VMEM; fall back to the whole batch otherwise.
    TB = B
    for cand in (512, 256, 128, 64, 32, 16, 8):
        if cand <= B and B % cand == 0:
            TB = cand
            break
    nb = B // TB

    f32 = jnp.float32
    mm_dtype = x.dtype if matmul_dtype is None else matmul_dtype

    # Transpose once here (XLA folds this under jit when w is a parameter) so
    # the kernel runs a plain row-major x @ W.
    w_t = jnp.asarray(w, f32).T.astype(mm_dtype)
    x_mm = jnp.asarray(x).astype(mm_dtype)
    mask_f = jnp.asarray(mask, f32)
    b_r = jnp.asarray(b, f32).reshape(1, D)
    g1_r = jnp.asarray(gamma1, f32).reshape(1, D)
    be1_r = jnp.asarray(beta1, f32).reshape(1, D)
    g2_r = jnp.asarray(gamma2, f32).reshape(1, D)
    be2_r = jnp.asarray(beta2, f32).reshape(1, D)

    kernel = functools.partial(_geu_reasoning_kernel, inv_n=1.0 / B)

    # Explicit VMEM budget with headroom (double-buffered tiles + resident W +
    # params/scratch), capped at v7x physical VMEM.
    mm_bytes = jnp.dtype(mm_dtype).itemsize
    est = (2 * TB * D * mm_bytes          # x tiles
           + 2 * TB * D * 4               # mask tiles
           + 2 * TB * D * 4               # out tiles
           + 2 * D * D * mm_bytes         # resident W (conservative x2)
           + 16 * 8 * max(D, 128) * 4)    # params + scratch (sublane padded)
    vmem_limit = min(2 * est + (8 << 20), 64 << 20)

    tile_map = lambda p, i: (i, 0)
    const_map = lambda p, i: (0, 0)

    return pl.pallas_call(
        kernel,
        out_shape=jax.ShapeDtypeStruct((B, D), x.dtype),
        grid=(2, nb),
        in_specs=[
            pl.BlockSpec((TB, D), tile_map),    # x
            pl.BlockSpec((TB, D), tile_map),    # mask
            pl.BlockSpec((D, D), const_map),    # W^T (VMEM-resident)
            pl.BlockSpec((1, D), const_map),    # b
            pl.BlockSpec((1, D), const_map),    # gamma1
            pl.BlockSpec((1, D), const_map),    # beta1
            pl.BlockSpec((1, D), const_map),    # gamma2
            pl.BlockSpec((1, D), const_map),    # beta2
        ],
        out_specs=pl.BlockSpec((TB, D), tile_map),
        scratch_shapes=[
            pltpu.VMEM((4, D), jnp.float32),    # BN sum / sum-of-squares accum
            pltpu.VMEM((4, D), jnp.float32),    # folded BN affine (a1,c1,a2,c2)
        ],
        compiler_params=pltpu.CompilerParams(
            # Batch-tile axis carries the cross-tile BN reduction in scratch ->
            # must stay sequential ("arbitrary"), same for the phase axis.
            dimension_semantics=("arbitrary", "arbitrary"),
            vmem_limit_bytes=int(vmem_limit),
        ),
    )(x_mm, mask_f, w_t, b_r, g1_r, be1_r, g2_r, be2_r)


def _reference(x, mask, w, b, gamma1, beta1, gamma2, beta2):
    x2 = x @ w.T + b

    def bn(v, g, be):
        mean = jnp.mean(v, axis=0, keepdims=True)
        var = jnp.mean((v - mean) ** 2, axis=0, keepdims=True)
        return (v - mean) / jnp.sqrt(var + BN_EPS) * g + be

    t = bn(mask, gamma1, beta1) + bn(x2, gamma2, beta2)
    y = x * jax.nn.sigmoid(t)
    norm = jnp.sqrt(jnp.sum(y * y, axis=1, keepdims=True))
    return y / jnp.maximum(norm, L2_EPS)


if __name__ == "__main__":
    B, D = 256, 128   # D multiple of 128 -> lane-dense; B tiles as 2 x (128, 128)

    key = jax.random.PRNGKey(0)
    ks = jax.random.split(key, 8)
    x = jax.random.normal(ks[0], (B, D), dtype=jnp.float32)
    mask = jax.random.normal(ks[1], (B, D), dtype=jnp.float32)

    bound = 1.0 / (D ** 0.5)
    w = jax.random.uniform(ks[2], (D, D), minval=-bound, maxval=bound,
                           dtype=jnp.float32)
    b = jax.random.uniform(ks[3], (D,), minval=-bound, maxval=bound,
                           dtype=jnp.float32)
    # Non-trivial BN affine params to exercise the full BN path.
    gamma1 = jax.random.uniform(ks[4], (D,), minval=0.5, maxval=1.5,
                                dtype=jnp.float32)
    beta1 = 0.1 * jax.random.normal(ks[5], (D,), dtype=jnp.float32)
    gamma2 = jax.random.uniform(ks[6], (D,), minval=0.5, maxval=1.5,
                                dtype=jnp.float32)
    beta2 = 0.1 * jax.random.normal(ks[7], (D,), dtype=jnp.float32)

    out = gated_embedding_unit_reasoning(x, mask, w, b,
                                         gamma1, beta1, gamma2, beta2)
    out = jax.block_until_ready(out)

    ref = _reference(x, mask, w, b, gamma1, beta1, gamma2, beta2)
    assert out.shape == (B, D)
    assert jnp.allclose(out, ref, atol=1e-4, rtol=1e-4), "mismatch vs reference"

    print("KERNEL_OK")
</pallas_src>

<mosaic_0001>
module attributes {stable_mosaic.version = 11 : i64} {
  func.func @_geu_reasoning_kernel(%arg0: i32, %arg1: i32, %arg2: memref<256x128xf32, #tpu.memory_space<vmem>>, %arg3: memref<256x128xf32, #tpu.memory_space<vmem>>, %arg4: memref<128x128xf32, #tpu.memory_space<vmem>>, %arg5: memref<1x128xf32, #tpu.memory_space<vmem>>, %arg6: memref<1x128xf32, #tpu.memory_space<vmem>>, %arg7: memref<1x128xf32, #tpu.memory_space<vmem>>, %arg8: memref<1x128xf32, #tpu.memory_space<vmem>>, %arg9: memref<1x128xf32, #tpu.memory_space<vmem>>, %arg10: memref<256x128xf32, #tpu.memory_space<vmem>>, %arg11: memref<4x128xf32, #tpu.memory_space<vmem>>, %arg12: memref<4x128xf32, #tpu.memory_space<vmem>>) attributes {dimension_semantics = [#tpu.dimension_semantics<arbitrary>, #tpu.dimension_semantics<arbitrary>], iteration_bounds = array<i64: 2, 1>, scalar_prefetch = 0 : i64, scratch_operands = 2 : i64, tpu.core_type = #tpu.core_type<tc>, window_params = [{transform_indices = @transform_0, window_bounds = array<i64: 256, 128>}, {transform_indices = @transform_1, window_bounds = array<i64: 256, 128>}, {pipeline_mode = #tpu.pipeline_mode<synchronous>, transform_indices = @transform_2, window_bounds = array<i64: 128, 128>}, {pipeline_mode = #tpu.pipeline_mode<synchronous>, transform_indices = @transform_3, window_bounds = array<i64: 1, 128>}, {pipeline_mode = #tpu.pipeline_mode<synchronous>, transform_indices = @transform_4, window_bounds = array<i64: 1, 128>}, {pipeline_mode = #tpu.pipeline_mode<synchronous>, transform_indices = @transform_5, window_bounds = array<i64: 1, 128>}, {pipeline_mode = #tpu.pipeline_mode<synchronous>, transform_indices = @transform_6, window_bounds = array<i64: 1, 128>}, {pipeline_mode = #tpu.pipeline_mode<synchronous>, transform_indices = @transform_7, window_bounds = array<i64: 1, 128>}, {transform_indices = @transform_8, window_bounds = array<i64: 256, 128>}]} {
    %c0 = arith.constant 0 : index
    %c0_0 = arith.constant 0 : index
    %0 = vector.load %arg2[%c0, %c0_0] : memref<256x128xf32, #tpu.memory_space<vmem>>, vector<256x128xf32>
    %c0_1 = arith.constant 0 : index
    %c0_2 = arith.constant 0 : index
    %1 = vector.load %arg4[%c0_1, %c0_2] : memref<128x128xf32, #tpu.memory_space<vmem>>, vector<128x128xf32>
    %cst = arith.constant dense<0.000000e+00> : vector<256x128xf32>
    %2 = tpu.matmul %0, %1, %cst {dimension_numbers = #tpu.dot_dimension_numbers<[1], [0], [0], [1], [0, 0, 1, 1], [], []>} : vector<256x128xf32>, vector<128x128xf32>, vector<256x128xf32> -> vector<256x128xf32>
    %c0_3 = arith.constant 0 : index
    %c0_4 = arith.constant 0 : index
    %3 = vector.load %arg5[%c0_3, %c0_4] : memref<1x128xf32, #tpu.memory_space<vmem>>, vector<1x128xf32>
    %4 = vector.broadcast %3 : vector<1x128xf32> to vector<256x128xf32>
    %5 = arith.addf %2, %4 : vector<256x128xf32>
    %c0_i32 = arith.constant 0 : i32
    %6 = arith.cmpi eq, %arg0, %c0_i32 : i32
    %c0_i32_5 = arith.constant 0 : i32
    %7 = arith.cmpi eq, %arg1, %c0_i32_5 : i32
    %8 = arith.andi %6, %7 : i1
    %9 = arith.extui %8 : i1 to i32
    %c0_i32_6 = arith.constant 0 : i32
    %10 = arith.cmpi ne, %9, %c0_i32_6 : i32
    scf.if %10 {
      %cst_13 = arith.constant 0.000000e+00 : f32
      %22 = vector.broadcast %cst_13 : f32 to vector<4x128xf32>
      %c0_14 = arith.constant 0 : index
      %c0_15 = arith.constant 0 : index
      %23 = vector.load %arg11[%c0_14, %c0_15] : memref<4x128xf32, #tpu.memory_space<vmem>>, vector<4x128xf32>
      tpu.vector_store %arg11[%c0_14, %c0_15], %22 {strides = array<i32>} : memref<4x128xf32, #tpu.memory_space<vmem>>, vector<4x128xf32>,
    } else {
    }
    %c0_i32_7 = arith.constant 0 : i32
    %11 = arith.cmpi eq, %arg0, %c0_i32_7 : i32
    %12 = arith.extui %11 : i1 to i32
    %c0_i32_8 = arith.constant 0 : i32
    %13 = arith.cmpi ne, %12, %c0_i32_8 : i32
    scf.if %13 {
      %c0_13 = arith.constant 0 : index
      %c0_14 = arith.constant 0 : index
      %22 = vector.load %arg3[%c0_13, %c0_14] : memref<256x128xf32, #tpu.memory_space<vmem>>, vector<256x128xf32>
      %c0_15 = arith.constant 0 : index
      %c0_16 = arith.constant 0 : index
      %23 = vector.load %arg11[%c0_15, %c0_16] : memref<4x128xf32, #tpu.memory_space<vmem>>, vector<1x128xf32>
      %cst_17 = arith.constant dense<0.000000e+00> : vector<128xf32>
      %24 = vector.multi_reduction <add>, %22, %cst_17 [0] : vector<256x128xf32> to vector<128xf32>
      %25 = vector.shape_cast %24 : vector<128xf32> to vector<1x128xf32>
      %26 = arith.addf %23, %25 : vector<1x128xf32>
      %c0_18 = arith.constant 0 : index
      %c0_19 = arith.constant 0 : index
      %27 = vector.load %arg11[%c0_18, %c0_19] : memref<4x128xf32, #tpu.memory_space<vmem>>, vector<1x128xf32>
      tpu.vector_store %arg11[%c0_18, %c0_19], %26 {strides = array<i32>} : memref<4x128xf32, #tpu.memory_space<vmem>>, vector<1x128xf32>,
      %c1 = arith.constant 1 : index
      %c0_20 = arith.constant 0 : index
      %28 = vector.load %arg11[%c1, %c0_20] : memref<4x128xf32, #tpu.memory_space<vmem>>, vector<1x128xf32>
      %29 = arith.mulf %22, %22 : vector<256x128xf32>
      %cst_21 = arith.constant dense<0.000000e+00> : vector<128xf32>
      %30 = vector.multi_reduction <add>, %29, %cst_21 [0] : vector<256x128xf32> to vector<128xf32>
      %31 = vector.shape_cast %30 : vector<128xf32> to vector<1x128xf32>
      %32 = arith.addf %28, %31 : vector<1x128xf32>
      %c1_22 = arith.constant 1 : index
      %c0_23 = arith.constant 0 : index
      %33 = vector.load %arg11[%c1_22, %c0_23] : memref<4x128xf32, #tpu.memory_space<vmem>>, vector<1x128xf32>
      tpu.vector_store %arg11[%c1_22, %c0_23], %32 {strides = array<i32>} : memref<4x128xf32, #tpu.memory_space<vmem>>, vector<1x128xf32>,
      %c2 = arith.constant 2 : index
      %c0_24 = arith.constant 0 : index
      %34 = vector.load %arg11[%c2, %c0_24] : memref<4x128xf32, #tpu.memory_space<vmem>>, vector<1x128xf32>
      %cst_25 = arith.constant dense<0.000000e+00> : vector<128xf32>
      %35 = vector.multi_reduction <add>, %5, %cst_25 [0] : vector<256x128xf32> to vector<128xf32>
      %36 = vector.shape_cast %35 : vector<128xf32> to vector<1x128xf32>
      %37 = arith.addf %34, %36 : vector<1x128xf32>
      %c2_26 = arith.constant 2 : index
      %c0_27 = arith.constant 0 : index
      %38 = vector.load %arg11[%c2_26, %c0_27] : memref<4x128xf32, #tpu.memory_space<vmem>>, vector<1x128xf32>
      tpu.vector_store %arg11[%c2_26, %c0_27], %37 {strides = array<i32>} : memref<4x128xf32, #tpu.memory_space<vmem>>, vector<1x128xf32>,
      %c3 = arith.constant 3 : index
      %c0_28 = arith.constant 0 : index
      %39 = vector.load %arg11[%c3, %c0_28] : memref<4x128xf32, #tpu.memory_space<vmem>>, vector<1x128xf32>
      %40 = arith.mulf %5, %5 : vector<256x128xf32>
      %cst_29 = arith.constant dense<0.000000e+00> : vector<128xf32>
      %41 = vector.multi_reduction <add>, %40, %cst_29 [0] : vector<256x128xf32> to vector<128xf32>
      %42 = vector.shape_cast %41 : vector<128xf32> to vector<1x128xf32>
      %43 = arith.addf %39, %42 : vector<1x128xf32>
      %c3_30 = arith.constant 3 : index
      %c0_31 = arith.constant 0 : index
      %44 = vector.load %arg11[%c3_30, %c0_31] : memref<4x128xf32, #tpu.memory_space<vmem>>, vector<1x128xf32>
      tpu.vector_store %arg11[%c3_30, %c0_31], %43 {strides = array<i32>} : memref<4x128xf32, #tpu.memory_space<vmem>>, vector<1x128xf32>,
      %c0_32 = arith.constant 0 : index
      %c0_33 = arith.constant 0 : index
      %45 = vector.load %arg10[%c0_32, %c0_33] : memref<256x128xf32, #tpu.memory_space<vmem>>, vector<256x128xf32>
      tpu.vector_store %arg10[%c0_32, %c0_33], %5 {strides = array<i32>} : memref<256x128xf32, #tpu.memory_space<vmem>>, vector<256x128xf32>,
    } else {
    }
    %c0_i32_9 = arith.constant 0 : i32
    %14 = arith.cmpi eq, %arg0, %c0_i32_9 : i32
    %c0_i32_10 = arith.constant 0 : i32
    %15 = arith.cmpi eq, %arg1, %c0_i32_10 : i32
    %16 = arith.andi %14, %15 : i1
    %17 = arith.extui %16 : i1 to i32
    %c0_i32_11 = arith.constant 0 : i32
    %18 = arith.cmpi ne, %17, %c0_i32_11 : i32
    scf.if %18 {
      %c0_13 = arith.constant 0 : index
      %c0_14 = arith.constant 0 : index
      %22 = vector.load %arg11[%c0_13, %c0_14] : memref<4x128xf32, #tpu.memory_space<vmem>>, vector<1x128xf32>
      %cst_15 = arith.constant 3.906250e-03 : f32
      %23 = vector.broadcast %cst_15 : f32 to vector<1x128xf32>
      %24 = arith.mulf %22, %23 : vector<1x128xf32>
      %c1 = arith.constant 1 : index
      %c0_16 = arith.constant 0 : index
      %25 = vector.load %arg11[%c1, %c0_16] : memref<4x128xf32, #tpu.memory_space<vmem>>, vector<1x128xf32>
      %cst_17 = arith.constant 3.906250e-03 : f32
      %26 = vector.broadcast %cst_17 : f32 to vector<1x128xf32>
      %27 = arith.mulf %25, %26 : vector<1x128xf32>
      %28 = arith.mulf %24, %24 : vector<1x128xf32>
      %29 = arith.subf %27, %28 : vector<1x128xf32>
      %c2 = arith.constant 2 : index
      %c0_18 = arith.constant 0 : index
      %30 = vector.load %arg11[%c2, %c0_18] : memref<4x128xf32, #tpu.memory_space<vmem>>, vector<1x128xf32>
      %cst_19 = arith.constant 3.906250e-03 : f32
      %31 = vector.broadcast %cst_19 : f32 to vector<1x128xf32>
      %32 = arith.mulf %30, %31 : vector<1x128xf32>
      %c3 = arith.constant 3 : index
      %c0_20 = arith.constant 0 : index
      %33 = vector.load %arg11[%c3, %c0_20] : memref<4x128xf32, #tpu.memory_space<vmem>>, vector<1x128xf32>
      %cst_21 = arith.constant 3.906250e-03 : f32
      %34 = vector.broadcast %cst_21 : f32 to vector<1x128xf32>
      %35 = arith.mulf %33, %34 : vector<1x128xf32>
      %36 = arith.mulf %32, %32 : vector<1x128xf32>
      %37 = arith.subf %35, %36 : vector<1x128xf32>
      %cst_22 = arith.constant 9.99999974E-6 : f32
      %38 = vector.broadcast %cst_22 : f32 to vector<1x128xf32>
      %39 = arith.addf %29, %38 : vector<1x128xf32>
      %40 = math.rsqrt %39 : vector<1x128xf32>
      %c0_23 = arith.constant 0 : index
      %c0_24 = arith.constant 0 : index
      %41 = vector.load %arg6[%c0_23, %c0_24] : memref<1x128xf32, #tpu.memory_space<vmem>>, vector<1x128xf32>
      %42 = arith.mulf %40, %41 : vector<1x128xf32>
      %cst_25 = arith.constant 9.99999974E-6 : f32
      %43 = vector.broadcast %cst_25 : f32 to vector<1x128xf32>
      %44 = arith.addf %37, %43 : vector<1x128xf32>
      %45 = math.rsqrt %44 : vector<1x128xf32>
      %c0_26 = arith.constant 0 : index
      %c0_27 = arith.constant 0 : index
      %46 = vector.load %arg8[%c0_26, %c0_27] : memref<1x128xf32, #tpu.memory_space<vmem>>, vector<1x128xf32>
      %47 = arith.mulf %45, %46 : vector<1x128xf32>
      %c0_28 = arith.constant 0 : index
      %c0_29 = arith.constant 0 : index
      %48 = vector.load %arg12[%c0_28, %c0_29] : memref<4x128xf32, #tpu.memory_space<vmem>>, vector<1x128xf32>
      tpu.vector_store %arg12[%c0_28, %c0_29], %42 {strides = array<i32>} : memref<4x128xf32, #tpu.memory_space<vmem>>, vector<1x128xf32>,
      %c0_30 = arith.constant 0 : index
      %c0_31 = arith.constant 0 : index
      %49 = vector.load %arg7[%c0_30, %c0_31] : memref<1x128xf32, #tpu.memory_space<vmem>>, vector<1x128xf32>
      %50 = arith.mulf %24, %42 : vector<1x128xf32>
      %51 = arith.subf %49, %50 : vector<1x128xf32>
      %c1_32 = arith.constant 1 : index
      %c0_33 = arith.constant 0 : index
      %52 = vector.load %arg12[%c1_32, %c0_33] : memref<4x128xf32, #tpu.memory_space<vmem>>, vector<1x128xf32>
      tpu.vector_store %arg12[%c1_32, %c0_33], %51 {strides = array<i32>} : memref<4x128xf32, #tpu.memory_space<vmem>>, vector<1x128xf32>,
      %c2_34 = arith.constant 2 : index
      %c0_35 = arith.constant 0 : index
      %53 = vector.load %arg12[%c2_34, %c0_35] : memref<4x128xf32, #tpu.memory_space<vmem>>, vector<1x128xf32>
      tpu.vector_store %arg12[%c2_34, %c0_35], %47 {strides = array<i32>} : memref<4x128xf32, #tpu.memory_space<vmem>>, vector<1x128xf32>,
      %c0_36 = arith.constant 0 : index
      %c0_37 = arith.constant 0 : index
      %54 = vector.load %arg9[%c0_36, %c0_37] : memref<1x128xf32, #tpu.memory_space<vmem>>, vector<1x128xf32>
      %55 = arith.mulf %32, %47 : vector<1x128xf32>
      %56 = arith.subf %54, %55 : vector<1x128xf32>
      %c3_38 = arith.constant 3 : index
      %c0_39 = arith.constant 0 : index
      %57 = vector.load %arg12[%c3_38, %c0_39] : memref<4x128xf32, #tpu.memory_space<vmem>>, vector<1x128xf32>
      tpu.vector_store %arg12[%c3_38, %c0_39], %56 {strides = array<i32>} : memref<4x128xf32, #tpu.memory_space<vmem>>, vector<1x128xf32>,
    } else {
    }
    %c1_i32 = arith.constant 1 : i32
    %19 = arith.cmpi eq, %arg0, %c1_i32 : i32
    %20 = arith.extui %19 : i1 to i32
    %c0_i32_12 = arith.constant 0 : i32
    %21 = arith.cmpi ne, %20, %c0_i32_12 : i32
    scf.if %21 {
      %c0_13 = arith.constant 0 : index
      %c0_14 = arith.constant 0 : index
      %22 = vector.load %arg2[%c0_13, %c0_14] : memref<256x128xf32, #tpu.memory_space<vmem>>, vector<256x128xf32>
      %c0_15 = arith.constant 0 : index
      %c0_16 = arith.constant 0 : index
      %23 = vector.load %arg3[%c0_15, %c0_16] : memref<256x128xf32, #tpu.memory_space<vmem>>, vector<256x128xf32>
      %c0_17 = arith.constant 0 : index
      %c0_18 = arith.constant 0 : index
      %24 = vector.load %arg12[%c0_17, %c0_18] : memref<4x128xf32, #tpu.memory_space<vmem>>, vector<1x128xf32>
      %25 = vector.broadcast %24 : vector<1x128xf32> to vector<256x128xf32>
      %26 = arith.mulf %23, %25 : vector<256x128xf32>
      %c1 = arith.constant 1 : index
      %c0_19 = arith.constant 0 : index
      %27 = vector.load %arg12[%c1, %c0_19] : memref<4x128xf32, #tpu.memory_space<vmem>>, vector<1x128xf32>
      %28 = vector.broadcast %27 : vector<1x128xf32> to vector<256x128xf32>
      %29 = arith.addf %26, %28 : vector<256x128xf32>
      %c2 = arith.constant 2 : index
      %c0_20 = arith.constant 0 : index
      %30 = vector.load %arg12[%c2, %c0_20] : memref<4x128xf32, #tpu.memory_space<vmem>>, vector<1x128xf32>
      %31 = vector.broadcast %30 : vector<1x128xf32> to vector<256x128xf32>
      %32 = arith.mulf %5, %31 : vector<256x128xf32>
      %33 = arith.addf %29, %32 : vector<256x128xf32>
      %c3 = arith.constant 3 : index
      %c0_21 = arith.constant 0 : index
      %34 = vector.load %arg12[%c3, %c0_21] : memref<4x128xf32, #tpu.memory_space<vmem>>, vector<1x128xf32>
      %35 = vector.broadcast %34 : vector<1x128xf32> to vector<256x128xf32>
      %36 = arith.addf %33, %35 : vector<256x128xf32>
      %37 = arith.negf %36 : vector<256x128xf32>
      %38 = math.exp %37 : vector<256x128xf32>
      %cst_22 = arith.constant 1.000000e+00 : f32
      %39 = vector.broadcast %cst_22 : f32 to vector<256x128xf32>
      %40 = arith.addf %39, %38 : vector<256x128xf32>
      %41 = arith.divf %39, %40 : vector<256x128xf32>
      %42 = arith.mulf %22, %41 : vector<256x128xf32>
      %43 = arith.mulf %42, %42 : vector<256x128xf32>
      %cst_23 = arith.constant dense<0.000000e+00> : vector<256xf32>
      %44 = vector.multi_reduction <add>, %43, %cst_23 [1] : vector<256x128xf32> to vector<256xf32>
      %45 = vector.shape_cast %44 : vector<256xf32> to vector<256x1xf32>
      %cst_24 = arith.constant 1.000000e-24 : f32
      %46 = vector.broadcast %cst_24 : f32 to vector<256x1xf32>
      %47 = arith.maximumf %45, %46 : vector<256x1xf32>
      %48 = math.rsqrt %47 : vector<256x1xf32>
      %49 = vector.broadcast %48 : vector<256x1xf32> to vector<256x128xf32>
      %50 = arith.mulf %42, %49 : vector<256x128xf32>
      %c0_25 = arith.constant 0 : index
      %c0_26 = arith.constant 0 : index
      %51 = vector.load %arg10[%c0_25, %c0_26] : memref<256x128xf32, #tpu.memory_space<vmem>>, vector<256x128xf32>
      tpu.vector_store %arg10[%c0_25, %c0_26], %50 {strides = array<i32>} : memref<256x128xf32, #tpu.memory_space<vmem>>, vector<256x128xf32>,
    } else {
    }
    return
  }
  func.func @transform_0(%arg0: i32, %arg1: i32) -> (i32, i32) {
    %c0_i32 = arith.constant 0 : i32
    %c0_i32_0 = arith.constant 0 : i32
    return %arg1, %c0_i32 : i32, i32
  }
  func.func @transform_1(%arg0: i32, %arg1: i32) -> (i32, i32) {
    %c0_i32 = arith.constant 0 : i32
    %c0_i32_0 = arith.constant 0 : i32
    return %arg1, %c0_i32 : i32, i32
  }
  func.func @transform_2(%arg0: i32, %arg1: i32) -> (i32, i32) {
    %c0_i32 = arith.constant 0 : i32
    %c0_i32_0 = arith.constant 0 : i32
    %c0_i32_1 = arith.constant 0 : i32
    return %c0_i32, %c0_i32_0 : i32, i32
  }
  func.func @transform_3(%arg0: i32, %arg1: i32) -> (i32, i32) {
    %c0_i32 = arith.constant 0 : i32
    %c0_i32_0 = arith.constant 0 : i32
    %c0_i32_1 = arith.constant 0 : i32
    return %c0_i32, %c0_i32_0 : i32, i32
  }
  func.func @transform_4(%arg0: i32, %arg1: i32) -> (i32, i32) {
    %c0_i32 = arith.constant 0 : i32
    %c0_i32_0 = arith.constant 0 : i32
    %c0_i32_1 = arith.constant 0 : i32
    return %c0_i32, %c0_i32_0 : i32, i32
  }
  func.func @transform_5(%arg0: i32, %arg1: i32) -> (i32, i32) {
    %c0_i32 = arith.constant 0 : i32
    %c0_i32_0 = arith.constant 0 : i32
    %c0_i32_1 = arith.constant 0 : i32
    return %c0_i32, %c0_i32_0 : i32, i32
  }
  func.func @transform_6(%arg0: i32, %arg1: i32) -> (i32, i32) {
    %c0_i32 = arith.constant 0 : i32
    %c0_i32_0 = arith.constant 0 : i32
    %c0_i32_1 = arith.constant 0 : i32
    return %c0_i32, %c0_i32_0 : i32, i32
  }
  func.func @transform_7(%arg0: i32, %arg1: i32) -> (i32, i32) {
    %c0_i32 = arith.constant 0 : i32
    %c0_i32_0 = arith.constant 0 : i32
    %c0_i32_1 = arith.constant 0 : i32
    return %c0_i32, %c0_i32_0 : i32, i32
  }
  func.func @transform_8(%arg0: i32, %arg1: i32) -> (i32, i32) {
    %c0_i32 = arith.constant 0 : i32
    %c0_i32_0 = arith.constant 0 : i32
    return %arg1, %c0_i32 : i32, i32
  }
}

</mosaic_0001>

<llo_original>
// kernel: gated_embedding_unit_reasoning.1
$region0: #{gated_embedding_unit_reasoning.1}
  #allocation0 [shape = 'u32[]', space=smem, size = 0x4, offset = 0x4, fixed_abs, tag = 'smem constant byte address 0x4 - core index']
  #allocation1 [shape = 'u32[144,128]{1,0:T(1,128)}', space=vmem, size = 0x12000, scoped, tag = 'internal scratch']
  #allocation2 [shape = 'f32[4,128]{1,0:T(4,128)}', space=vmem, size = 0x800, scoped, tag = 'scratch operand']
  #allocation3 [shape = 'f32[4,128]{1,0:T(4,128)}', space=vmem, size = 0x800, scoped, tag = 'scratch operand']
  %s0 = inlined_call_operand.vmem [shape: f32[256,128], index: 0, kind: input, shape index: {}]
  %s1 = inlined_call_operand.hbm [shape: f32[256,128], index: 1, kind: input, shape index: {}]
  %s2 = inlined_call_operand.vmem [shape: f32[128,128], index: 2, kind: input, shape index: {}]
  %s3 = inlined_call_operand.vmem [shape: f32[1,128], index: 3, kind: input, shape index: {}]
  %s4 = inlined_call_operand.vmem [shape: f32[1,128], index: 4, kind: input, shape index: {}]
  %s5 = inlined_call_operand.vmem [shape: f32[1,128], index: 5, kind: input, shape index: {}]
  %s6 = inlined_call_operand.vmem [shape: f32[1,128], index: 6, kind: input, shape index: {}]
  %s7 = inlined_call_operand.vmem [shape: f32[1,128], index: 7, kind: input, shape index: {}]
  %s8 = inlined_call_operand.hbm [shape: f32[256,128], index: 8, kind: output, shape index: {}]
  %s9 = sld [smem:[#allocation0]]
  $region85: #{gated_embedding_unit_reasoning.1} parent=0
    _
  %s11 = ssub.s32 1, %s9
  %s12 = scalar_select 0, %s11, %s9
  $region1: #{gated_embedding_unit_reasoning.1} parent=0
    #allocation4 [shape = 'u8[131072]{0}', space=vmem, size = 0x20000, scoped, tag = 'input window, operand 1, single buffered']
    #allocation5 [shape = 's32[2]{0}', space=sflag, size = 0x8, scoped, tag = 'scoped memory for gated_embedding_unit_reasoning.1']
    #allocation6 [shape = 's32[2]{0}', space=sflag, size = 0x8, scoped, tag = 'scoped memory for gated_embedding_unit_reasoning.1']
    #allocation7 [shape = 'u8[131072]{0}', space=vmem, size = 0x20000, scoped, tag = 'output window, operand 0, single buffered']
    %13 = vsyncpa [#allocation5], 0
    %14 = vsyncpa [#allocation6], 0
    loop: start=0, step=1, limit=4
    $region2: #{gated_embedding_unit_reasoning.1} parent=1 // loop_pre_header
      _
    $region3: #{gated_embedding_unit_reasoning.1} parent=1 // loop_header
      %s16 = sphi 0, %s20
      %p17 = scmp.ge.s32.totalorder %s16, 4
      %s23 = sphi 0, %s35
      %s24 = sphi 0, %s31
      %s25 = sphi 0, %s23
      %s26 = sphi 0, %s24
      %s27 = sphi 0, %s25
      %s28 = sphi 0, %s26
      %s38 = sphi 0, %s40
      %s41 = sphi 0, %s38
      %s42 = sphi 0, %s41
      %s58 = sphi 0, %s42
      %s64 = sphi 0, %s66
      %s67 = sphi 0, %s64
      %s68 = sphi 0, %s67
      %s84 = sphi 0, %s68
      %s88 = sphi 0, %s88
      %s90 = sphi 0, %s88
      %s91 = sphi 0, %s90
      %s105 = sphi 0, %s91
      %s109 = sphi 0, %s109
      %s111 = sphi 0, %s109
      %s112 = sphi 0, %s111
      %s126 = sphi 0, %s112
      %s130 = sphi 0, %s130
      %s132 = sphi 0, %s130
      %s133 = sphi 0, %s132
      %s147 = sphi 0, %s133
      %s151 = sphi 0, %s151
      %s153 = sphi 0, %s151
      %s154 = sphi 0, %s153
      %s168 = sphi 0, %s154
      %s172 = sphi 0, %s172
      %s174 = sphi 0, %s172
      %s175 = sphi 0, %s174
      %s189 = sphi 0, %s175
      %s193 = sphi 0, %s193
      %s195 = sphi 0, %s193
      %s196 = sphi 0, %s195
      %s210 = sphi 0, %s196
      %s216 = sphi 0, %s218
      %s219 = sphi 0, %s216
      %s220 = sphi 0, %s219
      %s236 = sphi 0, %s220
    $region4: #{gated_embedding_unit_reasoning.1} parent=1 // loop_header_branch
      %19 = sbr.rel (%p17) target = $region8
    $region5: #{gated_embedding_unit_reasoning.1} parent=1 // loop_body
      %s21 = ssub.s32 %s16, 1
      %s22 = ssub.s32 %s16, 2
      %s29 = sadd.s32 1, %s24
      %p30 = scmp.ge.s32.totalorder %s29, 1
      %s31 = scalar_select %p30, 0, %s29
      %s32 = sadd.s32 1, %s23
      %s33 = scalar_select %p30, %s32, %s23
      %p34 = scmp.ge.s32.totalorder %s33, 2
      %s35 = scalar_select %p34, 0, %s33
      %s36 = ssub.s32 %s24, %s31
      %p37 = scmp.eq.s32.totalorder %s36, 0
      %s39 = sadd.s32 %s38, 1
      %s40 = scalar_select %p37, %s38, %s39
      %p43 = pneg %p37
      %p44 = scmp.eq.s32.totalorder %s16, 1
      %p45 = por %p43, %p44
      %p46 = scmp.ne.s32.totalorder %s38, %s41
      %p47 = scmp.eq.s32.totalorder %s16, 0
      %p48 = por %p46, %p47
      %p49 = scmp.ne.s32.totalorder %s38, %s41
      %p50 = scmp.eq.s32.totalorder %s21, 1
      %p51 = por %p49, %p50
      %p52 = scmp.ne.s32.totalorder %s41, %s42
      %p53 = scmp.eq.s32.totalorder %s21, 0
      %p54 = por %p52, %p53
      %p55 = scmp.ne.s32.totalorder %s41, %s42
      %p56 = scmp.eq.s32.totalorder %s22, 1
      %p57 = por %p55, %p56
      %p59 = scmp.ne.s32.totalorder %s42, %s58
      %p60 = scmp.eq.s32.totalorder %s22, 0
      %p61 = por %p59, %p60
      %s62 = ssub.s32 %s24, %s31
      %p63 = scmp.eq.s32.totalorder %s62, 0
      %s65 = sadd.s32 %s64, 1
      %s66 = scalar_select %p63, %s64, %s65
      %p69 = pneg %p63
      %p70 = scmp.eq.s32.totalorder %s16, 1
      %p71 = por %p69, %p70
      %p72 = scmp.ne.s32.totalorder %s64, %s67
      %p73 = scmp.eq.s32.totalorder %s16, 0
      %p74 = por %p72, %p73
      %p75 = scmp.ne.s32.totalorder %s64, %s67
      %p76 = scmp.eq.s32.totalorder %s21, 1
      %p77 = por %p75, %p76
      %p78 = scmp.ne.s32.totalorder %s67, %s68
      %p79 = scmp.eq.s32.totalorder %s21, 0
      %p80 = por %p78, %p79
      %p81 = scmp.ne.s32.totalorder %s67, %s68
      %p82 = scmp.eq.s32.totalorder %s22, 1
      %p83 = por %p81, %p82
      %p85 = scmp.ne.s32.totalorder %s68, %s84
      %p86 = scmp.eq.s32.totalorder %s22, 0
      %p87 = por %p85, %p86
      %s89 = sadd.s32 %s88, 1
      %p92 = scmp.eq.s32.totalorder %s16, 1
      %p93 = scmp.ne.s32.totalorder %s88, %s90
      %p94 = scmp.eq.s32.totalorder %s16, 0
      %p95 = por %p93, %p94
      %p96 = scmp.ne.s32.totalorder %s88, %s90
      %p97 = scmp.eq.s32.totalorder %s21, 1
      %p98 = por %p96, %p97
      %p99 = scmp.ne.s32.totalorder %s90, %s91
      %p100 = scmp.eq.s32.totalorder %s21, 0
      %p101 = por %p99, %p100
      %p102 = scmp.ne.s32.totalorder %s90, %s91
      %p103 = scmp.eq.s32.totalorder %s22, 1
      %p104 = por %p102, %p103
      %p106 = scmp.ne.s32.totalorder %s91, %s105
      %p107 = scmp.eq.s32.totalorder %s22, 0
      %p108 = por %p106, %p107
      %s110 = sadd.s32 %s109, 1
      %p113 = scmp.eq.s32.totalorder %s16, 1
      %p114 = scmp.ne.s32.totalorder %s109, %s111
      %p115 = scmp.eq.s32.totalorder %s16, 0
      %p116 = por %p114, %p115
      %p117 = scmp.ne.s32.totalorder %s109, %s111
      %p118 = scmp.eq.s32.totalorder %s21, 1
      %p119 = por %p117, %p118
      %p120 = scmp.ne.s32.totalorder %s111, %s112
      %p121 = scmp.eq.s32.totalorder %s21, 0
      %p122 = por %p120, %p121
      %p123 = scmp.ne.s32.totalorder %s111, %s112
      %p124 = scmp.eq.s32.totalorder %s22, 1
      %p125 = por %p123, %p124
      %p127 = scmp.ne.s32.totalorder %s112, %s126
      %p128 = scmp.eq.s32.totalorder %s22, 0
      %p129 = por %p127, %p128
      %s131 = sadd.s32 %s130, 1
      %p134 = scmp.eq.s32.totalorder %s16, 1
      %p135 = scmp.ne.s32.totalorder %s130, %s132
      %p136 = scmp.eq.s32.totalorder %s16, 0
      %p137 = por %p135, %p136
      %p138 = scmp.ne.s32.totalorder %s130, %s132
      %p139 = scmp.eq.s32.totalorder %s21, 1
      %p140 = por %p138, %p139
      %p141 = scmp.ne.s32.totalorder %s132, %s133
      %p142 = scmp.eq.s32.totalorder %s21, 0
      %p143 = por %p141, %p142
      %p144 = scmp.ne.s32.totalorder %s132, %s133
      %p145 = scmp.eq.s32.totalorder %s22, 1
      %p146 = por %p144, %p145
      %p148 = scmp.ne.s32.totalorder %s133, %s147
      %p149 = scmp.eq.s32.totalorder %s22, 0
      %p150 = por %p148, %p149
      %s152 = sadd.s32 %s151, 1
      %p155 = scmp.eq.s32.totalorder %s16, 1
      %p156 = scmp.ne.s32.totalorder %s151, %s153
      %p157 = scmp.eq.s32.totalorder %s16, 0
      %p158 = por %p156, %p157
      %p159 = scmp.ne.s32.totalorder %s151, %s153
      %p160 = scmp.eq.s32.totalorder %s21, 1
      %p161 = por %p159, %p160
      %p162 = scmp.ne.s32.totalorder %s153, %s154
      %p163 = scmp.eq.s32.totalorder %s21, 0
      %p164 = por %p162, %p163
      %p165 = scmp.ne.s32.totalorder %s153, %s154
      %p166 = scmp.eq.s32.totalorder %s22, 1
      %p167 = por %p165, %p166
      %p169 = scmp.ne.s32.totalorder %s154, %s168
      %p170 = scmp.eq.s32.totalorder %s22, 0
      %p171 = por %p169, %p170
      %s173 = sadd.s32 %s172, 1
      %p176 = scmp.eq.s32.totalorder %s16, 1
      %p177 = scmp.ne.s32.totalorder %s172, %s174
      %p178 = scmp.eq.s32.totalorder %s16, 0
      %p179 = por %p177, %p178
      %p180 = scmp.ne.s32.totalorder %s172, %s174
      %p181 = scmp.eq.s32.totalorder %s21, 1
      %p182 = por %p180, %p181
      %p183 = scmp.ne.s32.totalorder %s174, %s175
      %p184 = scmp.eq.s32.totalorder %s21, 0
      %p185 = por %p183, %p184
      %p186 = scmp.ne.s32.totalorder %s174, %s175
      %p187 = scmp.eq.s32.totalorder %s22, 1
      %p188 = por %p186, %p187
      %p190 = scmp.ne.s32.totalorder %s175, %s189
      %p191 = scmp.eq.s32.totalorder %s22, 0
      %p192 = por %p190, %p191
      %s194 = sadd.s32 %s193, 1
      %p197 = scmp.eq.s32.totalorder %s16, 1
      %p198 = scmp.ne.s32.totalorder %s193, %s195
      %p199 = scmp.eq.s32.totalorder %s16, 0
      %p200 = por %p198, %p199
      %p201 = scmp.ne.s32.totalorder %s193, %s195
      %p202 = scmp.eq.s32.totalorder %s21, 1
      %p203 = por %p201, %p202
      %p204 = scmp.ne.s32.totalorder %s195, %s196
      %p205 = scmp.eq.s32.totalorder %s21, 0
      %p206 = por %p204, %p205
      %p207 = scmp.ne.s32.totalorder %s195, %s196
      %p208 = scmp.eq.s32.totalorder %s22, 1
      %p209 = por %p207, %p208
      %p211 = scmp.ne.s32.totalorder %s196, %s210
      %p212 = scmp.eq.s32.totalorder %s22, 0
      %p213 = por %p211, %p212
      %s214 = ssub.s32 %s24, %s31
      %p215 = scmp.eq.s32.totalorder %s214, 0
      %s217 = sadd.s32 %s216, 1
      %s218 = scalar_select %p215, %s216, %s217
      %p221 = pneg %p215
      %p222 = scmp.eq.s32.totalorder %s16, 1
      %p223 = por %p221, %p222
      %p224 = scmp.ne.s32.totalorder %s216, %s219
      %p225 = scmp.eq.s32.totalorder %s16, 0
      %p226 = por %p224, %p225
      %p227 = scmp.ne.s32.totalorder %s216, %s219
      %p228 = scmp.eq.s32.totalorder %s21, 1
      %p229 = por %p227, %p228
      %p230 = scmp.ne.s32.totalorder %s219, %s220
      %p231 = scmp.eq.s32.totalorder %s21, 0
      %p232 = por %p230, %p231
      %p233 = scmp.ne.s32.totalorder %s219, %s220
      %p234 = scmp.eq.s32.totalorder %s22, 1
      %p235 = por %p233, %p234
      %p237 = scmp.ne.s32.totalorder %s220, %s236
      %p238 = scmp.eq.s32.totalorder %s22, 0
      %p239 = por %p237, %p238
      %p240 = scmp.le.s32.totalorder 1, %s16
      %p241 = scmp.lt.s32.totalorder %s16, 3
      %p242 = pnand %p240, %p241
      %p243 = pneg %p242
      // Predicated region
      $region9: #{gated_embedding_unit_reasoning.1} parent=5 // pred_check
        _
      $region10: #{gated_embedding_unit_reasoning.1} parent=5 // pred_check_branch
        %245 = sbr.rel (%p242) target = $region12
      $region11: #{gated_embedding_unit_reasoning.1} parent=5 // pred_region
        %s246 = ssub.s32 %s16, 1
        // Predicated region
        $region13: #{gated_embedding_unit_reasoning.1} parent=11 // pred_check
          %p247 = pneg %p54
        $region14: #{gated_embedding_unit_reasoning.1} parent=11 // pred_check_branch
          %249 = sbr.rel (%p247) target = $region16
        $region15: #{gated_embedding_unit_reasoning.1} parent=11 // pred_region
          %s250 = smul.u32 32, %s26
          %p251 = scmp.lt.s32.totalorder %s250, 31
          %s252 = scalar_select %p251, %s250, 31
          %s253 = smul.addr %s252, 8
          %s254 = scalar_lea.vmem %s0, %s253
          %s255 = smul.u32 32, %s26
        $region16: #{gated_embedding_unit_reasoning.1} parent=11 // pred_fallthru
          _
        // Predicated region
        $region17: #{gated_embedding_unit_reasoning.1} parent=11 // pred_check
          %p256 = pneg %p80
        $region18: #{gated_embedding_unit_reasoning.1} parent=11 // pred_check_branch
          %258 = sbr.rel (%p256) target = $region20
        $region19: #{gated_embedding_unit_reasoning.1} parent=11 // pred_region
          %s259 = smul.u32 32, %s26
          %s261 = ssub.s32 4096, 4096
          %262 = vsyncadd [#allocation5], %s261
          %s263 = smul.addr %s259, 128
          %s264 = scalar_lea.hbm %s1, %s263
          %s265 = sshll.u32 [#allocation4], 4
          %s266 = int_to_ptr.vmem [resolvable:$true] %s265
          %271 = dma.hbm_to_vmem [thread:$0]  %s264, 4096, %s266, [#allocation5], 128, 128, 8
        $region20: #{gated_embedding_unit_reasoning.1} parent=11 // pred_fallthru
          _
        // Predicated region
        $region21: #{gated_embedding_unit_reasoning.1} parent=11 // pred_check
          %p272 = pneg %p101
        $region22: #{gated_embedding_unit_reasoning.1} parent=11 // pred_check_branch
          %274 = sbr.rel (%p272) target = $region24
        $region23: #{gated_embedding_unit_reasoning.1} parent=11 // pred_region
          _
        $region24: #{gated_embedding_unit_reasoning.1} parent=11 // pred_fallthru
          _
        // Predicated region
        $region25: #{gated_embedding_unit_reasoning.1} parent=11 // pred_check
          %p275 = pneg %p122
        $region26: #{gated_embedding_unit_reasoning.1} parent=11 // pred_check_branch
          %277 = sbr.rel (%p275) target = $region28
        $region27: #{gated_embedding_unit_reasoning.1} parent=11 // pred_region
          _
        $region28: #{gated_embedding_unit_reasoning.1} parent=11 // pred_fallthru
          _
        // Predicated region
        $region29: #{gated_embedding_unit_reasoning.1} parent=11 // pred_check
          %p278 = pneg %p143
        $region30: #{gated_embedding_unit_reasoning.1} parent=11 // pred_check_branch
          %280 = sbr.rel (%p278) target = $region32
        $region31: #{gated_embedding_unit_reasoning.1} parent=11 // pred_region
          _
        $region32: #{gated_embedding_unit_reasoning.1} parent=11 // pred_fallthru
          _
        // Predicated region
        $region33: #{gated_embedding_unit_reasoning.1} parent=11 // pred_check
          %p281 = pneg %p164
        $region34: #{gated_embedding_unit_reasoning.1} parent=11 // pred_check_branch
          %283 = sbr.rel (%p281) target = $region36
        $region35: #{gated_embedding_unit_reasoning.1} parent=11 // pred_region
          _
        $region36: #{gated_embedding_unit_reasoning.1} parent=11 // pred_fallthru
          _
        // Predicated region
        $region37: #{gated_embedding_unit_reasoning.1} parent=11 // pred_check
          %p284 = pneg %p185
        $region38: #{gated_embedding_unit_reasoning.1} parent=11 // pred_check_branch
          %286 = sbr.rel (%p284) target = $region40
        $region39: #{gated_embedding_unit_reasoning.1} parent=11 // pred_region
          _
        $region40: #{gated_embedding_unit_reasoning.1} parent=11 // pred_fallthru
          _
        // Predicated region
        $region41: #{gated_embedding_unit_reasoning.1} parent=11 // pred_check
          %p287 = pneg %p206
        $region42: #{gated_embedding_unit_reasoning.1} parent=11 // pred_check_branch
          %289 = sbr.rel (%p287) target = $region44
        $region43: #{gated_embedding_unit_reasoning.1} parent=11 // pred_region
          _
        $region44: #{gated_embedding_unit_reasoning.1} parent=11 // pred_fallthru
          _
      $region12: #{gated_embedding_unit_reasoning.1} parent=5 // pred_fallthru
        _
      %p290 = scmp.lt.s32.totalorder %s16, 2
      // Predicated region
      $region45: #{gated_embedding_unit_reasoning.1} parent=5 // pred_check
        %p291 = pneg %p290
      $region46: #{gated_embedding_unit_reasoning.1} parent=5 // pred_check_branch
        %293 = sbr.rel (%p291) target = $region48
      $region47: #{gated_embedding_unit_reasoning.1} parent=5 // pred_region
        _
      $region48: #{gated_embedding_unit_reasoning.1} parent=5 // pred_fallthru
        _
      %p294 = scmp.le.s32.totalorder 1, %s16
      %p295 = scmp.lt.s32.totalorder %s16, 3
      %p296 = pnand %p294, %p295
      %p297 = pneg %p296
      // Predicated region
      $region49: #{gated_embedding_unit_reasoning.1} parent=5 // pred_check
        _
      $region50: #{gated_embedding_unit_reasoning.1} parent=5 // pred_check_branch
        %299 = sbr.rel (%p296) target = $region52
      $region51: #{gated_embedding_unit_reasoning.1} parent=5 // pred_region
        %s300 = ssub.s32 %s16, 1
        // Predicated region
        $region53: #{gated_embedding_unit_reasoning.1} parent=51 // pred_check
          %p301 = pneg %p80
        $region54: #{gated_embedding_unit_reasoning.1} parent=51 // pred_check_branch
          %303 = sbr.rel (%p301) target = $region56
        $region55: #{gated_embedding_unit_reasoning.1} parent=51 // pred_region
          %304 = dma.done [#allocation5], 4096
        $region56: #{gated_embedding_unit_reasoning.1} parent=51 // pred_fallthru
          _
        %s305 = smul.u32 32, %s26
        %p306 = scmp.lt.s32.totalorder %s305, 31
        %s307 = scalar_select %p306, %s305, 31
        %s308 = smul.addr %s307, 8
        %s309 = scalar_lea.vmem %s0, %s308
        %p310 = pneg %p54
        %p311 = pneg %p51
        %p312 = pneg %p80
        %p313 = pneg %p77
        %p314 = pneg %p101
        %p315 = pneg %p98
        %p316 = pneg %p122
        %p317 = pneg %p119
        %p318 = pneg %p143
        %p319 = pneg %p140
        %p320 = pneg %p164
        %p321 = pneg %p161
        %p322 = pneg %p185
        %p323 = pneg %p182
        %p324 = pneg %p206
        %p325 = pneg %p203
        %p326 = pneg %p232
        %p327 = pneg %p229
        %s328 = smul.u32 32, %s26
        %p329 = scmp.lt.s32.totalorder %s328, 31
        %s330 = scalar_select %p329, %s328, 31
        %s331 = smul.addr %s330, 8
        %s332 = scalar_lea.vmem %s0, %s331
        %s333 = smul.u32 32, %s26
        %s334 = smul.u32 32, %s26
        %s335 = smul.u32 32, %s26
        %v336 = vld [vmem:[%s332] sm:$0xff]
        %v337 = vld [vmem:[%s332 + $0x8] sm:$0xff]
        %v338 = vld [vmem:[%s332 + $0x10] sm:$0xff]
        %v339 = vld [vmem:[%s332 + $0x18] sm:$0xff]
        %v340 = vld [vmem:[%s332 + $0x20] sm:$0xff]
        %v341 = vld [vmem:[%s332 + $0x28] sm:$0xff]
        %v342 = vld [vmem:[%s332 + $0x30] sm:$0xff]
        %v343 = vld [vmem:[%s332 + $0x38] sm:$0xff]
        %v344 = vld [vmem:[%s332 + $0x40] sm:$0xff]
        %v345 = vld [vmem:[%s332 + $0x48] sm:$0xff]
        %v346 = vld [vmem:[%s332 + $0x50] sm:$0xff]
        %v347 = vld [vmem:[%s332 + $0x58] sm:$0xff]
        %v348 = vld [vmem:[%s332 + $0x60] sm:$0xff]
        %v349 = vld [vmem:[%s332 + $0x68] sm:$0xff]
        %v350 = vld [vmem:[%s332 + $0x70] sm:$0xff]
        %v351 = vld [vmem:[%s332 + $0x78] sm:$0xff]
        %v352 = vld [vmem:[%s332 + $0x80] sm:$0xff]
        %v353 = vld [vmem:[%s332 + $0x88] sm:$0xff]
        %v354 = vld [vmem:[%s332 + $0x90] sm:$0xff]
        %v355 = vld [vmem:[%s332 + $0x98] sm:$0xff]
        %v356 = vld [vmem:[%s332 + $0xa0] sm:$0xff]
        %v357 = vld [vmem:[%s332 + $0xa8] sm:$0xff]
        %v358 = vld [vmem:[%s332 + $0xb0] sm:$0xff]
        %v359 = vld [vmem:[%s332 + $0xb8] sm:$0xff]
        %v360 = vld [vmem:[%s332 + $0xc0] sm:$0xff]
        %v361 = vld [vmem:[%s332 + $0xc8] sm:$0xff]
        %v362 = vld [vmem:[%s332 + $0xd0] sm:$0xff]
        %v363 = vld [vmem:[%s332 + $0xd8] sm:$0xff]
        %v364 = vld [vmem:[%s332 + $0xe0] sm:$0xff]
        %v365 = vld [vmem:[%s332 + $0xe8] sm:$0xff]
        %v366 = vld [vmem:[%s332 + $0xf0] sm:$0xff]
        %v367 = vld [vmem:[%s332 + $0xf8] sm:$0xff]
        %v368 = vld [vmem:[%s2] sm:$0xff]
        %v369 = vld [vmem:[%s2 + $0x8] sm:$0xff]
        %v370 = vld [vmem:[%s2 + $0x10] sm:$0xff]
        %v371 = vld [vmem:[%s2 + $0x18] sm:$0xff]
        %v372 = vld [vmem:[%s2 + $0x20] sm:$0xff]
        %v373 = vld [vmem:[%s2 + $0x28] sm:$0xff]
        %v374 = vld [vmem:[%s2 + $0x30] sm:$0xff]
        %v375 = vld [vmem:[%s2 + $0x38] sm:$0xff]
        %v376 = vld [vmem:[%s2 + $0x40] sm:$0xff]
        %v377 = vld [vmem:[%s2 + $0x48] sm:$0xff]
        %v378 = vld [vmem:[%s2 + $0x50] sm:$0xff]
        %v379 = vld [vmem:[%s2 + $0x58] sm:$0xff]
        %v380 = vld [vmem:[%s2 + $0x60] sm:$0xff]
        %v381 = vld [vmem:[%s2 + $0x68] sm:$0xff]
        %v382 = vld [vmem:[%s2 + $0x70] sm:$0xff]
        %v383 = vld [vmem:[%s2 + $0x78] sm:$0xff]
        %v384 = vld [vmem:[%s3] sm:$0x1]
        %v386 = vlaneseq
        %v387 = vshrl.u32 %v386, 7
        %v388 = vsub.s32 0, %v387
        %v389 = vrot.slane %v384, %v388
        %391 = vmatprep.subr.mxu0 0.0
        %392 = vmatpush1.msra.mxu0 %v383
        %393 = vmatprep.subr.mxu0 0.0
        %394 = vmatpush1.msra.mxu0 %v382
        %395 = vmatprep.subr.mxu0 0.0
        %396 = vmatpush1.msra.mxu0 %v381
        %397 = vmatprep.subr.mxu0 0.0
        %398 = vmatpush1.msra.mxu0 %v380
        %399 = vmatprep.subr.mxu0 0.0
        %400 = vmatpush1.msra.mxu0 %v379
        %401 = vmatprep.subr.mxu0 0.0
        %402 = vmatpush1.msra.mxu0 %v378
        %403 = vmatprep.subr.mxu0 0.0
        %404 = vmatpush1.msra.mxu0 %v377
        %405 = vmatprep.subr.mxu0 0.0
        %406 = vmatpush1.msra.mxu0 %v376
        %407 = vmatprep.subr.mxu0 0.0
        %408 = vmatpush1.msra.mxu0 %v375
        %409 = vmatprep.subr.mxu0 0.0
        %410 = vmatpush1.msra.mxu0 %v374
        %411 = vmatprep.subr.mxu0 0.0
        %412 = vmatpush1.msra.mxu0 %v373
        %413 = vmatprep.subr.mxu0 0.0
        %414 = vmatpush1.msra.mxu0 %v372
        %415 = vmatprep.subr.mxu0 0.0
        %416 = vmatpush1.msra.mxu0 %v371
        %417 = vmatprep.subr.mxu0 0.0
        %418 = vmatpush1.msra.mxu0 %v370
        %419 = vmatprep.subr.mxu0 0.0
        %420 = vmatpush1.msra.mxu0 %v369
        %421 = vmatprep.subr.mxu0 0.0
        %422 = vmatpush1.msra.mxu0 %v368
        %423 = vmatprep.subr.mxu0 0.0
        %424 = vmatpush2.msra.mxu0 0.0
        %425 = vmatprep.subr.mxu0 0.0
        %426 = vmatpush2.msra.mxu0 0.0
        %427 = vmatprep.subr.mxu0 0.0
        %428 = vmatpush2.msra.mxu0 0.0
        %429 = vmatprep.subr.mxu0 0.0
        %430 = vmatpush2.msra.mxu0 0.0
        %431 = vmatprep.subr.mxu0 0.0
        %432 = vmatpush2.msra.mxu0 0.0
        %433 = vmatprep.subr.mxu0 0.0
        %434 = vmatpush2.msra.mxu0 0.0
        %435 = vmatprep.subr.mxu0 0.0
        %436 = vmatpush2.msra.mxu0 0.0
        %437 = vmatprep.subr.mxu0 0.0
        %438 = vmatpush2.msra.mxu0 0.0
        %439 = vmatprep.subr.mxu0 0.0
        %440 = vmatpush2.msra.mxu0 0.0
        %441 = vmatprep.subr.mxu0 0.0
        %442 = vmatpush2.msra.mxu0 0.0
        %443 = vmatprep.subr.mxu0 0.0
        %444 = vmatpush2.msra.mxu0 0.0
        %445 = vmatprep.subr.mxu0 0.0
        %446 = vmatpush2.msra.mxu0 0.0
        %447 = vmatprep.subr.mxu0 0.0
        %448 = vmatpush2.msra.mxu0 0.0
        %449 = vmatprep.subr.mxu0 0.0
        %450 = vmatpush2.msra.mxu0 0.0
        %451 = vmatprep.subr.mxu0 0.0
        %452 = vmatpush2.msra.mxu0 0.0
        %453 = vmatprep.subr.mxu0 0.0
        %454 = vmatpush2.msra.mxu0 0.0
        %455 = vmatprep.mubr.f32.mxu0 0.0
        %456 = vmatmul.mubr.f32.gmra.mxu0 %v336
        %v457 = vpop.f32.mrf.mxu0
        %v458 = vadd.f32 %v389, %v457
        %v459 = vpop.f32.mrf.mxu0
        %460 = vmatprep.mubr.f32.mxu0 0.0
        %461 = vmatmul.mubr.f32.gmra.mxu0 %v337
        %v462 = vpop.f32.mrf.mxu0
        %v463 = vadd.f32 %v389, %v462
        %v464 = vpop.f32.mrf.mxu0
        %465 = vmatprep.mubr.f32.mxu0 0.0
        %466 = vmatmul.mubr.f32.gmra.mxu0 %v338
        %v467 = vpop.f32.mrf.mxu0
        %v468 = vadd.f32 %v389, %v467
        %v469 = vpop.f32.mrf.mxu0
        %470 = vmatprep.mubr.f32.mxu0 0.0
        %471 = vmatmul.mubr.f32.gmra.mxu0 %v339
        %v472 = vpop.f32.mrf.mxu0
        %v473 = vadd.f32 %v389, %v472
        %v474 = vpop.f32.mrf.mxu0
        %475 = vmatprep.mubr.f32.mxu0 0.0
        %476 = vmatmul.mubr.f32.gmra.mxu0 %v340
        %v477 = vpop.f32.mrf.mxu0
        %v478 = vadd.f32 %v389, %v477
        %v479 = vpop.f32.mrf.mxu0
        %480 = vmatprep.mubr.f32.mxu0 0.0
        %481 = vmatmul.mubr.f32.gmra.mxu0 %v341
        %v482 = vpop.f32.mrf.mxu0
        %v483 = vadd.f32 %v389, %v482
        %v484 = vpop.f32.mrf.mxu0
        %485 = vmatprep.mubr.f32.mxu0 0.0
        %486 = vmatmul.mubr.f32.gmra.mxu0 %v342
        %v487 = vpop.f32.mrf.mxu0
        %v488 = vadd.f32 %v389, %v487
        %v489 = vpop.f32.mrf.mxu0
        %490 = vmatprep.mubr.f32.mxu0 0.0
        %491 = vmatmul.mubr.f32.gmra.mxu0 %v343
        %v492 = vpop.f32.mrf.mxu0
        %v493 = vadd.f32 %v389, %v492
        %v494 = vpop.f32.mrf.mxu0
        %495 = vmatprep.mubr.f32.mxu0 0.0
        %496 = vmatmul.mubr.f32.gmra.mxu0 %v344
        %v497 = vpop.f32.mrf.mxu0
        %v498 = vadd.f32 %v389, %v497
        %v499 = vpop.f32.mrf.mxu0
        %500 = vmatprep.mubr.f32.mxu0 0.0
        %501 = vmatmul.mubr.f32.gmra.mxu0 %v345
        %v502 = vpop.f32.mrf.mxu0
        %v503 = vadd.f32 %v389, %v502
        %v504 = vpop.f32.mrf.mxu0
        %505 = vmatprep.mubr.f32.mxu0 0.0
        %506 = vmatmul.mubr.f32.gmra.mxu0 %v346
        %v507 = vpop.f32.mrf.mxu0
        %v508 = vadd.f32 %v389, %v507
        %v509 = vpop.f32.mrf.mxu0
        %510 = vmatprep.mubr.f32.mxu0 0.0
        %511 = vmatmul.mubr.f32.gmra.mxu0 %v347
        %v512 = vpop.f32.mrf.mxu0
        %v513 = vadd.f32 %v389, %v512
        %v514 = vpop.f32.mrf.mxu0
        %515 = vmatprep.mubr.f32.mxu0 0.0
        %516 = vmatmul.mubr.f32.gmra.mxu0 %v348
        %v517 = vpop.f32.mrf.mxu0
        %v518 = vadd.f32 %v389, %v517
        %v519 = vpop.f32.mrf.mxu0
        %520 = vmatprep.mubr.f32.mxu0 0.0
        %521 = vmatmul.mubr.f32.gmra.mxu0 %v349
        %v522 = vpop.f32.mrf.mxu0
        %v523 = vadd.f32 %v389, %v522
        %v524 = vpop.f32.mrf.mxu0
        %525 = vmatprep.mubr.f32.mxu0 0.0
        %526 = vmatmul.mubr.f32.gmra.mxu0 %v350
        %v527 = vpop.f32.mrf.mxu0
        %v528 = vadd.f32 %v389, %v527
        %v529 = vpop.f32.mrf.mxu0
        %530 = vmatprep.mubr.f32.mxu0 0.0
        %531 = vmatmul.mubr.f32.gmra.mxu0 %v351
        %v532 = vpop.f32.mrf.mxu0
        %v533 = vadd.f32 %v389, %v532
        %v534 = vpop.f32.mrf.mxu0
        %535 = vmatprep.mubr.f32.mxu0 0.0
        %536 = vmatmul.mubr.f32.gmra.mxu0 %v352
        %v537 = vpop.f32.mrf.mxu0
        %v538 = vadd.f32 %v389, %v537
        %v539 = vpop.f32.mrf.mxu0
        %540 = vmatprep.mubr.f32.mxu0 0.0
        %541 = vmatmul.mubr.f32.gmra.mxu0 %v353
        %v542 = vpop.f32.mrf.mxu0
        %v543 = vadd.f32 %v389, %v542
        %v544 = vpop.f32.mrf.mxu0
        %545 = vmatprep.mubr.f32.mxu0 0.0
        %546 = vmatmul.mubr.f32.gmra.mxu0 %v354
        %v547 = vpop.f32.mrf.mxu0
        %v548 = vadd.f32 %v389, %v547
        %v549 = vpop.f32.mrf.mxu0
        %550 = vmatprep.mubr.f32.mxu0 0.0
        %551 = vmatmul.mubr.f32.gmra.mxu0 %v355
        %v552 = vpop.f32.mrf.mxu0
        %v553 = vadd.f32 %v389, %v552
        %v554 = vpop.f32.mrf.mxu0
        %555 = vmatprep.mubr.f32.mxu0 0.0
        %556 = vmatmul.mubr.f32.gmra.mxu0 %v356
        %v557 = vpop.f32.mrf.mxu0
        %v558 = vadd.f32 %v389, %v557
        %v559 = vpop.f32.mrf.mxu0
        %560 = vmatprep.mubr.f32.mxu0 0.0
        %561 = vmatmul.mubr.f32.gmra.mxu0 %v357
        %v562 = vpop.f32.mrf.mxu0
        %v563 = vadd.f32 %v389, %v562
        %v564 = vpop.f32.mrf.mxu0
        %565 = vmatprep.mubr.f32.mxu0 0.0
        %566 = vmatmul.mubr.f32.gmra.mxu0 %v358
        %v567 = vpop.f32.mrf.mxu0
        %v568 = vadd.f32 %v389, %v567
        %v569 = vpop.f32.mrf.mxu0
        %570 = vmatprep.mubr.f32.mxu0 0.0
        %571 = vmatmul.mubr.f32.gmra.mxu0 %v359
        %v572 = vpop.f32.mrf.mxu0
        %v573 = vadd.f32 %v389, %v572
        %v574 = vpop.f32.mrf.mxu0
        %575 = vmatprep.mubr.f32.mxu0 0.0
        %576 = vmatmul.mubr.f32.gmra.mxu0 %v360
        %v577 = vpop.f32.mrf.mxu0
        %v578 = vadd.f32 %v389, %v577
        %v579 = vpop.f32.mrf.mxu0
        %580 = vmatprep.mubr.f32.mxu0 0.0
        %581 = vmatmul.mubr.f32.gmra.mxu0 %v361
        %v582 = vpop.f32.mrf.mxu0
        %v583 = vadd.f32 %v389, %v582
        %v584 = vpop.f32.mrf.mxu0
        %585 = vmatprep.mubr.f32.mxu0 0.0
        %586 = vmatmul.mubr.f32.gmra.mxu0 %v362
        %v587 = vpop.f32.mrf.mxu0
        %v588 = vadd.f32 %v389, %v587
        %v589 = vpop.f32.mrf.mxu0
        %590 = vmatprep.mubr.f32.mxu0 0.0
        %591 = vmatmul.mubr.f32.gmra.mxu0 %v363
        %v592 = vpop.f32.mrf.mxu0
        %v593 = vadd.f32 %v389, %v592
        %v594 = vpop.f32.mrf.mxu0
        %595 = vmatprep.mubr.f32.mxu0 0.0
        %596 = vmatmul.mubr.f32.gmra.mxu0 %v364
        %v597 = vpop.f32.mrf.mxu0
        %v598 = vadd.f32 %v389, %v597
        %v599 = vpop.f32.mrf.mxu0
        %600 = vmatprep.mubr.f32.mxu0 0.0
        %601 = vmatmul.mubr.f32.gmra.mxu0 %v365
        %v602 = vpop.f32.mrf.mxu0
        %v603 = vadd.f32 %v389, %v602
        %v604 = vpop.f32.mrf.mxu0
        %605 = vmatprep.mubr.f32.mxu0 0.0
        %606 = vmatmul.mubr.f32.gmra.mxu0 %v366
        %v607 = vpop.f32.mrf.mxu0
        %v608 = vadd.f32 %v389, %v607
        %v609 = vpop.f32.mrf.mxu0
        %610 = vmatprep.mubr.f32.mxu0 0.0
        %611 = vmatmul.mubr.f32.gmra.mxu0 %v367
        %v612 = vpop.f32.mrf.mxu0
        %v613 = vadd.f32 %v389, %v612
        %v614 = vpop.f32.mrf.mxu0
        %615 = vdwg.mxu0
        %p616 = scmp.eq.s32.totalorder %s25, 0
        %p617 = scmp.eq.s32.totalorder %s26, 0
        %p618 = pnand %p616, %p617
        %p619 = pneg %p618
        // Predicated region
        $region57: #{gated_embedding_unit_reasoning.1} parent=51 // pred_check
          _
        $region58: #{gated_embedding_unit_reasoning.1} parent=51 // pred_check_branch
          %621 = sbr.rel (%p618) target = $region60
        $region59: #{gated_embedding_unit_reasoning.1} parent=51 // pred_region
          %622 = vst [vmem:[#allocation2] sm:$0xf] 0.0
        $region60: #{gated_embedding_unit_reasoning.1} parent=51 // pred_fallthru
          _
        // Predicated region
        $region61: #{gated_embedding_unit_reasoning.1} parent=51 // pred_check
          %p623 = pneg %p616
        $region62: #{gated_embedding_unit_reasoning.1} parent=51 // pred_check_branch
          %625 = sbr.rel (%p623) target = $region64
        $region63: #{gated_embedding_unit_reasoning.1} parent=51 // pred_region
          %v626 = vld [vmem:[#allocation4] sm:$0xff]
          %v627 = vld [vmem:[#allocation4 + $0x8] sm:$0xff]
          %v628 = vld [vmem:[#allocation4 + $0x10] sm:$0xff]
          %v629 = vld [vmem:[#allocation4 + $0x18] sm:$0xff]
          %v630 = vld [vmem:[#allocation4 + $0x20] sm:$0xff]
          %v631 = vld [vmem:[#allocation4 + $0x28] sm:$0xff]
          %v632 = vld [vmem:[#allocation4 + $0x30] sm:$0xff]
          %v633 = vld [vmem:[#allocation4 + $0x38] sm:$0xff]
          %v634 = vld [vmem:[#allocation4 + $0x40] sm:$0xff]
          %v635 = vld [vmem:[#allocation4 + $0x48] sm:$0xff]
          %v636 = vld [vmem:[#allocation4 + $0x50] sm:$0xff]
          %v637 = vld [vmem:[#allocation4 + $0x58] sm:$0xff]
          %v638 = vld [vmem:[#allocation4 + $0x60] sm:$0xff]
          %v639 = vld [vmem:[#allocation4 + $0x68] sm:$0xff]
          %v640 = vld [vmem:[#allocation4 + $0x70] sm:$0xff]
          %v641 = vld [vmem:[#allocation4 + $0x78] sm:$0xff]
          %v642 = vld [vmem:[#allocation4 + $0x80] sm:$0xff]
          %v643 = vld [vmem:[#allocation4 + $0x88] sm:$0xff]
          %v644 = vld [vmem:[#allocation4 + $0x90] sm:$0xff]
          %v645 = vld [vmem:[#allocation4 + $0x98] sm:$0xff]
          %v646 = vld [vmem:[#allocation4 + $0xa0] sm:$0xff]
          %v647 = vld [vmem:[#allocation4 + $0xa8] sm:$0xff]
          %v648 = vld [vmem:[#allocation4 + $0xb0] sm:$0xff]
          %v649 = vld [vmem:[#allocation4 + $0xb8] sm:$0xff]
          %v650 = vld [vmem:[#allocation4 + $0xc0] sm:$0xff]
          %v651 = vld [vmem:[#allocation4 + $0xc8] sm:$0xff]
          %v652 = vld [vmem:[#allocation4 + $0xd0] sm:$0xff]
          %v653 = vld [vmem:[#allocation4 + $0xd8] sm:$0xff]
          %v654 = vld [vmem:[#allocation4 + $0xe0] sm:$0xff]
          %v655 = vld [vmem:[#allocation4 + $0xe8] sm:$0xff]
          %v656 = vld [vmem:[#allocation4 + $0xf0] sm:$0xff]
          %v657 = vld [vmem:[#allocation4 + $0xf8] sm:$0xff]
          %v658 = vld [vmem:[#allocation2] sm:$0x1]
          %v659 = vadd.f32 %v626, %v627
          %v660 = vadd.f32 %v659, %v628
          %v661 = vadd.f32 %v660, %v629
          %v662 = vadd.f32 %v661, %v630
          %v663 = vadd.f32 %v662, %v631
          %v664 = vadd.f32 %v663, %v632
          %v665 = vadd.f32 %v664, %v633
          %v666 = vadd.f32 %v665, %v634
          %v667 = vadd.f32 %v666, %v635
          %v668 = vadd.f32 %v667, %v636
          %v669 = vadd.f32 %v668, %v637
          %v670 = vadd.f32 %v669, %v638
          %v671 = vadd.f32 %v670, %v639
          %v672 = vadd.f32 %v671, %v640
          %v673 = vadd.f32 %v672, %v641
          %v674 = vadd.f32 %v673, %v642
          %v675 = vadd.f32 %v674, %v643
          %v676 = vadd.f32 %v675, %v644
          %v677 = vadd.f32 %v676, %v645
          %v678 = vadd.f32 %v677, %v646
          %v679 = vadd.f32 %v678, %v647
          %v680 = vadd.f32 %v679, %v648
          %v681 = vadd.f32 %v680, %v649
          %v682 = vadd.f32 %v681, %v650
          %v683 = vadd.f32 %v682, %v651
          %v684 = vadd.f32 %v683, %v652
          %v685 = vadd.f32 %v684, %v653
          %v686 = vadd.f32 %v685, %v654
          %v687 = vadd.f32 %v686, %v655
          %v688 = vadd.f32 %v687, %v656
          %v689 = vadd.f32 %v688, %v657
          %v690 = vrot.slane %v689, 4
          %v691 = vadd.f32 %v689, %v690
          %v692 = vrot.slane %v691, 2
          %v693 = vadd.f32 %v691, %v692
          %v694 = vrot.slane %v693, 1
          %v695 = vadd.f32 %v693, %v694
          %v696 = vadd.f32 %v658, %v695
          %697 = vst [vmem:[#allocation2] sm:$0x1] %v696
          %v698 = vld [vmem:[#allocation2 + $0x1] sm:$0x1]
          %v699 = vmul.f32 %v626, %v626
          %v700 = vmul.f32 %v627, %v627
          %v701 = vmul.f32 %v628, %v628
          %v702 = vmul.f32 %v629, %v629
          %v703 = vmul.f32 %v630, %v630
          %v704 = vmul.f32 %v631, %v631
          %v705 = vmul.f32 %v632, %v632
          %v706 = vmul.f32 %v633, %v633
          %v707 = vmul.f32 %v634, %v634
          %v708 = vmul.f32 %v635, %v635
          %v709 = vmul.f32 %v636, %v636
          %v710 = vmul.f32 %v637, %v637
          %v711 = vmul.f32 %v638, %v638
          %v712 = vmul.f32 %v639, %v639
          %v713 = vmul.f32 %v640, %v640
          %v714 = vmul.f32 %v641, %v641
          %v715 = vmul.f32 %v642, %v642
          %v716 = vmul.f32 %v643, %v643
          %v717 = vmul.f32 %v644, %v644
          %v718 = vmul.f32 %v645, %v645
          %v719 = vmul.f32 %v646, %v646
          %v720 = vmul.f32 %v647, %v647
          %v721 = vmul.f32 %v648, %v648
          %v722 = vmul.f32 %v649, %v649
          %v723 = vmul.f32 %v650, %v650
          %v724 = vmul.f32 %v651, %v651
          %v725 = vmul.f32 %v652, %v652
          %v726 = vmul.f32 %v653, %v653
          %v727 = vmul.f32 %v654, %v654
          %v728 = vmul.f32 %v655, %v655
          %v729 = vmul.f32 %v656, %v656
          %v730 = vmul.f32 %v657, %v657
          %v731 = vadd.f32 %v699, %v700
          %v732 = vadd.f32 %v731, %v701
          %v733 = vadd.f32 %v732, %v702
          %v734 = vadd.f32 %v733, %v703
          %v735 = vadd.f32 %v734, %v704
          %v736 = vadd.f32 %v735, %v705
          %v737 = vadd.f32 %v736, %v706
          %v738 = vadd.f32 %v737, %v707
          %v739 = vadd.f32 %v738, %v708
          %v740 = vadd.f32 %v739, %v709
          %v741 = vadd.f32 %v740, %v710
          %v742 = vadd.f32 %v741, %v711
          %v743 = vadd.f32 %v742, %v712
          %v744 = vadd.f32 %v743, %v713
          %v745 = vadd.f32 %v744, %v714
          %v746 = vadd.f32 %v745, %v715
          %v747 = vadd.f32 %v746, %v716
          %v748 = vadd.f32 %v747, %v717
          %v749 = vadd.f32 %v748, %v718
          %v750 = vadd.f32 %v749, %v719
          %v751 = vadd.f32 %v750, %v720
          %v752 = vadd.f32 %v751, %v721
          %v753 = vadd.f32 %v752, %v722
          %v754 = vadd.f32 %v753, %v723
          %v755 = vadd.f32 %v754, %v724
          %v756 = vadd.f32 %v755, %v725
          %v757 = vadd.f32 %v756, %v726
          %v758 = vadd.f32 %v757, %v727
          %v759 = vadd.f32 %v758, %v728
          %v760 = vadd.f32 %v759, %v729
          %v761 = vadd.f32 %v760, %v730
          %v762 = vrot.slane %v761, 4
          %v763 = vadd.f32 %v761, %v762
          %v764 = vrot.slane %v763, 2
          %v765 = vadd.f32 %v763, %v764
          %v766 = vrot.slane %v765, 1
          %v767 = vadd.f32 %v765, %v766
          %v768 = vadd.f32 %v698, %v767
          %769 = vst [vmem:[#allocation2 + $0x1] sm:$0x1] %v768
          %v770 = vld [vmem:[#allocation2 + $0x2] sm:$0x1]
          %v771 = vadd.f32 %v458, %v463
          %v772 = vadd.f32 %v771, %v468
          %v773 = vadd.f32 %v772, %v473
          %v774 = vadd.f32 %v773, %v478
          %v775 = vadd.f32 %v774, %v483
          %v776 = vadd.f32 %v775, %v488
          %v777 = vadd.f32 %v776, %v493
          %v778 = vadd.f32 %v777, %v498
          %v779 = vadd.f32 %v778, %v503
          %v780 = vadd.f32 %v779, %v508
          %v781 = vadd.f32 %v780, %v513
          %v782 = vadd.f32 %v781, %v518
          %v783 = vadd.f32 %v782, %v523
          %v784 = vadd.f32 %v783, %v528
          %v785 = vadd.f32 %v784, %v533
          %v786 = vadd.f32 %v785, %v538
          %v787 = vadd.f32 %v786, %v543
          %v788 = vadd.f32 %v787, %v548
          %v789 = vadd.f32 %v788, %v553
          %v790 = vadd.f32 %v789, %v558
          %v791 = vadd.f32 %v790, %v563
          %v792 = vadd.f32 %v791, %v568
          %v793 = vadd.f32 %v792, %v573
          %v794 = vadd.f32 %v793, %v578
          %v795 = vadd.f32 %v794, %v583
          %v796 = vadd.f32 %v795, %v588
          %v797 = vadd.f32 %v796, %v593
          %v798 = vadd.f32 %v797, %v598
          %v799 = vadd.f32 %v798, %v603
          %v800 = vadd.f32 %v799, %v608
          %v801 = vadd.f32 %v800, %v613
          %v802 = vrot.slane %v801, 4
          %v803 = vadd.f32 %v801, %v802
          %v804 = vrot.slane %v803, 2
          %v805 = vadd.f32 %v803, %v804
          %v806 = vrot.slane %v805, 1
          %v807 = vadd.f32 %v805, %v806
          %v808 = vadd.f32 %v770, %v807
          %809 = vst [vmem:[#allocation2 + $0x2] sm:$0x1] %v808
          %v810 = vld [vmem:[#allocation2 + $0x3] sm:$0x1]
          %v811 = vmul.f32 %v458, %v458
          %v812 = vmul.f32 %v463, %v463
          %v813 = vmul.f32 %v468, %v468
          %v814 = vmul.f32 %v473, %v473
          %v815 = vmul.f32 %v478, %v478
          %v816 = vmul.f32 %v483, %v483
          %v817 = vmul.f32 %v488, %v488
          %v818 = vmul.f32 %v493, %v493
          %v819 = vmul.f32 %v498, %v498
          %v820 = vmul.f32 %v503, %v503
          %v821 = vmul.f32 %v508, %v508
          %v822 = vmul.f32 %v513, %v513
          %v823 = vmul.f32 %v518, %v518
          %v824 = vmul.f32 %v523, %v523
          %v825 = vmul.f32 %v528, %v528
          %v826 = vmul.f32 %v533, %v533
          %v827 = vmul.f32 %v538, %v538
          %v828 = vmul.f32 %v543, %v543
          %v829 = vmul.f32 %v548, %v548
          %v830 = vmul.f32 %v553, %v553
          %v831 = vmul.f32 %v558, %v558
          %v832 = vmul.f32 %v563, %v563
          %v833 = vmul.f32 %v568, %v568
          %v834 = vmul.f32 %v573, %v573
          %v835 = vmul.f32 %v578, %v578
          %v836 = vmul.f32 %v583, %v583
          %v837 = vmul.f32 %v588, %v588
          %v838 = vmul.f32 %v593, %v593
          %v839 = vmul.f32 %v598, %v598
          %v840 = vmul.f32 %v603, %v603
          %v841 = vmul.f32 %v608, %v608
          %v842 = vmul.f32 %v613, %v613
          %v843 = vadd.f32 %v811, %v812
          %v844 = vadd.f32 %v843, %v813
          %v845 = vadd.f32 %v844, %v814
          %v846 = vadd.f32 %v845, %v815
          %v847 = vadd.f32 %v846, %v816
          %v848 = vadd.f32 %v847, %v817
          %v849 = vadd.f32 %v848, %v818
          %v850 = vadd.f32 %v849, %v819
          %v851 = vadd.f32 %v850, %v820
          %v852 = vadd.f32 %v851, %v821
          %v853 = vadd.f32 %v852, %v822
          %v854 = vadd.f32 %v853, %v823
          %v855 = vadd.f32 %v854, %v824
          %v856 = vadd.f32 %v855, %v825
          %v857 = vadd.f32 %v856, %v826
          %v858 = vadd.f32 %v857, %v827
          %v859 = vadd.f32 %v858, %v828
          %v860 = vadd.f32 %v859, %v829
          %v861 = vadd.f32 %v860, %v830
          %v862 = vadd.f32 %v861, %v831
          %v863 = vadd.f32 %v862, %v832
          %v864 = vadd.f32 %v863, %v833
          %v865 = vadd.f32 %v864, %v834
          %v866 = vadd.f32 %v865, %v835
          %v867 = vadd.f32 %v866, %v836
          %v868 = vadd.f32 %v867, %v837
          %v869 = vadd.f32 %v868, %v838
          %v870 = vadd.f32 %v869, %v839
          %v871 = vadd.f32 %v870, %v840
          %v872 = vadd.f32 %v871, %v841
          %v873 = vadd.f32 %v872, %v842
          %v874 = vrot.slane %v873, 4
          %v875 = vadd.f32 %v873, %v874
          %v876 = vrot.slane %v875, 2
          %v877 = vadd.f32 %v875, %v876
          %v878 = vrot.slane %v877, 1
          %v879 = vadd.f32 %v877, %v878
          %v880 = vadd.f32 %v810, %v879
          %881 = vst [vmem:[#allocation2 + $0x3] sm:$0x1] %v880
          %882 = vst [vmem:[#allocation7] sm:$0xff] %v458
          %883 = vst [vmem:[#allocation7 + $0x8] sm:$0xff] %v463
          %884 = vst [vmem:[#allocation7 + $0x10] sm:$0xff] %v468
          %885 = vst [vmem:[#allocation7 + $0x18] sm:$0xff] %v473
          %886 = vst [vmem:[#allocation7 + $0x20] sm:$0xff] %v478
          %887 = vst [vmem:[#allocation7 + $0x28] sm:$0xff] %v483
          %888 = vst [vmem:[#allocation7 + $0x30] sm:$0xff] %v488
          %889 = vst [vmem:[#allocation7 + $0x38] sm:$0xff] %v493
          %890 = vst [vmem:[#allocation7 + $0x40] sm:$0xff] %v498
          %891 = vst [vmem:[#allocation7 + $0x48] sm:$0xff] %v503
          %892 = vst [vmem:[#allocation7 + $0x50] sm:$0xff] %v508
          %893 = vst [vmem:[#allocation7 + $0x58] sm:$0xff] %v513
          %894 = vst [vmem:[#allocation7 + $0x60] sm:$0xff] %v518
          %895 = vst [vmem:[#allocation7 + $0x68] sm:$0xff] %v523
          %896 = vst [vmem:[#allocation7 + $0x70] sm:$0xff] %v528
          %897 = vst [vmem:[#allocation7 + $0x78] sm:$0xff] %v533
          %898 = vst [vmem:[#allocation7 + $0x80] sm:$0xff] %v538
          %899 = vst [vmem:[#allocation7 + $0x88] sm:$0xff] %v543
          %900 = vst [vmem:[#allocation7 + $0x90] sm:$0xff] %v548
          %901 = vst [vmem:[#allocation7 + $0x98] sm:$0xff] %v553
          %902 = vst [vmem:[#allocation7 + $0xa0] sm:$0xff] %v558
          %903 = vst [vmem:[#allocation7 + $0xa8] sm:$0xff] %v563
          %904 = vst [vmem:[#allocation7 + $0xb0] sm:$0xff] %v568
          %905 = vst [vmem:[#allocation7 + $0xb8] sm:$0xff] %v573
          %906 = vst [vmem:[#allocation7 + $0xc0] sm:$0xff] %v578
          %907 = vst [vmem:[#allocation7 + $0xc8] sm:$0xff] %v583
          %908 = vst [vmem:[#allocation7 + $0xd0] sm:$0xff] %v588
          %909 = vst [vmem:[#allocation7 + $0xd8] sm:$0xff] %v593
          %910 = vst [vmem:[#allocation7 + $0xe0] sm:$0xff] %v598
          %911 = vst [vmem:[#allocation7 + $0xe8] sm:$0xff] %v603
          %912 = vst [vmem:[#allocation7 + $0xf0] sm:$0xff] %v608
          %913 = vst [vmem:[#allocation7 + $0xf8] sm:$0xff] %v613
        $region64: #{gated_embedding_unit_reasoning.1} parent=51 // pred_fallthru
          _
        // Predicated region
        $region65: #{gated_embedding_unit_reasoning.1} parent=51 // pred_check
          _
        $region66: #{gated_embedding_unit_reasoning.1} parent=51 // pred_check_branch
          %915 = sbr.rel (%p618) target = $region68
        $region67: #{gated_embedding_unit_reasoning.1} parent=51 // pred_region
          %v916 = vld [vmem:[#allocation2] sm:$0x1]
          %v917 = vmul.f32 %v916, 0.00390625
          %v918 = vld [vmem:[#allocation2 + $0x1] sm:$0x1]
          %v919 = vmul.f32 %v918, 0.00390625
          %v920 = vmul.f32 %v917, %v917
          %v921 = vsub.f32 %v919, %v920
          %v922 = vld [vmem:[#allocation2 + $0x2] sm:$0x1]
          %v923 = vmul.f32 %v922, 0.00390625
          %v924 = vld [vmem:[#allocation2 + $0x3] sm:$0x1]
          %v925 = vmul.f32 %v924, 0.00390625
          %v926 = vmul.f32 %v923, %v923
          %v927 = vsub.f32 %v925, %v926
          %v928 = vadd.f32 %v921, 1e-05
          %v929 = vrsqrt.pop %v928
          %v930 = vld [vmem:[%s4] sm:$0x1]
          %v931 = vmul.f32 %v929, %v930
          %v932 = vadd.f32 %v927, 1e-05
          %v933 = vrsqrt.pop %v932
          %v934 = vld [vmem:[%s6] sm:$0x1]
          %v935 = vmul.f32 %v933, %v934
          %936 = vst [vmem:[#allocation3] sm:$0x1] %v931
          %v937 = vld [vmem:[%s5] sm:$0x1]
          %v938 = vmul.f32 %v917, %v931
          %v939 = vsub.f32 %v937, %v938
          %940 = vst [vmem:[#allocation3 + $0x1] sm:$0x1] %v939
          %941 = vst [vmem:[#allocation3 + $0x2] sm:$0x1] %v935
          %v942 = vld [vmem:[%s7] sm:$0x1]
          %v943 = vmul.f32 %v923, %v935
          %v944 = vsub.f32 %v942, %v943
          %945 = vst [vmem:[#allocation3 + $0x3] sm:$0x1] %v944
        $region68: #{gated_embedding_unit_reasoning.1} parent=51 // pred_fallthru
          _
        %p946 = scmp.eq.s32.totalorder %s25, 1
        // Predicated region
        $region69: #{gated_embedding_unit_reasoning.1} parent=51 // pred_check
          %p947 = pneg %p946
        $region70: #{gated_embedding_unit_reasoning.1} parent=51 // pred_check_branch
          %949 = sbr.rel (%p947) target = $region72
        $region71: #{gated_embedding_unit_reasoning.1} parent=51 // pred_region
          %v950 = vld [vmem:[%s332] sm:$0xff]
          %v951 = vld [vmem:[%s332 + $0x8] sm:$0xff]
          %v952 = vld [vmem:[%s332 + $0x10] sm:$0xff]
          %v953 = vld [vmem:[%s332 + $0x18] sm:$0xff]
          %v954 = vld [vmem:[%s332 + $0x20] sm:$0xff]
          %v955 = vld [vmem:[%s332 + $0x28] sm:$0xff]
          %v956 = vld [vmem:[%s332 + $0x30] sm:$0xff]
          %v957 = vld [vmem:[%s332 + $0x38] sm:$0xff]
          %v958 = vld [vmem:[%s332 + $0x40] sm:$0xff]
          %v959 = vld [vmem:[%s332 + $0x48] sm:$0xff]
          %v960 = vld [vmem:[%s332 + $0x50] sm:$0xff]
          %v961 = vld [vmem:[%s332 + $0x58] sm:$0xff]
          %v962 = vld [vmem:[%s332 + $0x60] sm:$0xff]
          %v963 = vld [vmem:[%s332 + $0x68] sm:$0xff]
          %v964 = vld [vmem:[%s332 + $0x70] sm:$0xff]
          %v965 = vld [vmem:[%s332 + $0x78] sm:$0xff]
          %v966 = vld [vmem:[%s332 + $0x80] sm:$0xff]
          %v967 = vld [vmem:[%s332 + $0x88] sm:$0xff]
          %v968 = vld [vmem:[%s332 + $0x90] sm:$0xff]
          %v969 = vld [vmem:[%s332 + $0x98] sm:$0xff]
          %v970 = vld [vmem:[%s332 + $0xa0] sm:$0xff]
          %v971 = vld [vmem:[%s332 + $0xa8] sm:$0xff]
          %v972 = vld [vmem:[%s332 + $0xb0] sm:$0xff]
          %v973 = vld [vmem:[%s332 + $0xb8] sm:$0xff]
          %v974 = vld [vmem:[%s332 + $0xc0] sm:$0xff]
          %v975 = vld [vmem:[%s332 + $0xc8] sm:$0xff]
          %v976 = vld [vmem:[%s332 + $0xd0] sm:$0xff]
          %v977 = vld [vmem:[%s332 + $0xd8] sm:$0xff]
          %v978 = vld [vmem:[%s332 + $0xe0] sm:$0xff]
          %v979 = vld [vmem:[%s332 + $0xe8] sm:$0xff]
          %v980 = vld [vmem:[%s332 + $0xf0] sm:$0xff]
          %v981 = vld [vmem:[%s332 + $0xf8] sm:$0xff]
          %v982 = vld [vmem:[#allocation4] sm:$0xff]
          %v983 = vld [vmem:[#allocation4 + $0x8] sm:$0xff]
          %v984 = vld [vmem:[#allocation4 + $0x10] sm:$0xff]
          %v985 = vld [vmem:[#allocation4 + $0x18] sm:$0xff]
          %v986 = vld [vmem:[#allocation4 + $0x20] sm:$0xff]
          %v987 = vld [vmem:[#allocation4 + $0x28] sm:$0xff]
          %v988 = vld [vmem:[#allocation4 + $0x30] sm:$0xff]
          %v989 = vld [vmem:[#allocation4 + $0x38] sm:$0xff]
          %v990 = vld [vmem:[#allocation4 + $0x40] sm:$0xff]
          %v991 = vld [vmem:[#allocation4 + $0x48] sm:$0xff]
          %v992 = vld [vmem:[#allocation4 + $0x50] sm:$0xff]
          %v993 = vld [vmem:[#allocation4 + $0x58] sm:$0xff]
          %v994 = vld [vmem:[#allocation4 + $0x60] sm:$0xff]
          %v995 = vld [vmem:[#allocation4 + $0x68] sm:$0xff]
          %v996 = vld [vmem:[#allocation4 + $0x70] sm:$0xff]
          %v997 = vld [vmem:[#allocation4 + $0x78] sm:$0xff]
          %v998 = vld [vmem:[#allocation4 + $0x80] sm:$0xff]
          %v999 = vld [vmem:[#allocation4 + $0x88] sm:$0xff]
          %v1000 = vld [vmem:[#allocation4 + $0x90] sm:$0xff]
          %v1001 = vld [vmem:[#allocation4 + $0x98] sm:$0xff]
          %v1002 = vld [vmem:[#allocation4 + $0xa0] sm:$0xff]
          %v1003 = vld [vmem:[#allocation4 + $0xa8] sm:$0xff]
          %v1004 = vld [vmem:[#allocation4 + $0xb0] sm:$0xff]
          %v1005 = vld [vmem:[#allocation4 + $0xb8] sm:$0xff]
          %v1006 = vld [vmem:[#allocation4 + $0xc0] sm:$0xff]
          %v1007 = vld [vmem:[#allocation4 + $0xc8] sm:$0xff]
          %v1008 = vld [vmem:[#allocation4 + $0xd0] sm:$0xff]
          %v1009 = vld [vmem:[#allocation4 + $0xd8] sm:$0xff]
          %v1010 = vld [vmem:[#allocation4 + $0xe0] sm:$0xff]
          %v1011 = vld [vmem:[#allocation4 + $0xe8] sm:$0xff]
          %v1012 = vld [vmem:[#allocation4 + $0xf0] sm:$0xff]
          %v1013 = vld [vmem:[#allocation4 + $0xf8] sm:$0xff]
          %v1014 = vld [vmem:[#allocation3] sm:$0x1]
          %v1015 = vlaneseq
          %v1016 = vshrl.u32 %v1015, 7
          %v1017 = vsub.s32 0, %v1016
          %v1018 = vrot.slane %v1014, %v1017
          %v1019 = vmul.f32 %v982, %v1018
          %v1020 = vmul.f32 %v983, %v1018
          %v1021 = vmul.f32 %v984, %v1018
          %v1022 = vmul.f32 %v985, %v1018
          %v1023 = vmul.f32 %v986, %v1018
          %v1024 = vmul.f32 %v987, %v1018
          %v1025 = vmul.f32 %v988, %v1018
          %v1026 = vmul.f32 %v989, %v1018
          %v1027 = vmul.f32 %v990, %v1018
          %v1028 = vmul.f32 %v991, %v1018
          %v1029 = vmul.f32 %v992, %v1018
          %v1030 = vmul.f32 %v993, %v1018
          %v1031 = vmul.f32 %v994, %v1018
          %v1032 = vmul.f32 %v995, %v1018
          %v1033 = vmul.f32 %v996, %v1018
          %v1034 = vmul.f32 %v997, %v1018
          %v1035 = vmul.f32 %v998, %v1018
          %v1036 = vmul.f32 %v999, %v1018
          %v1037 = vmul.f32 %v1000, %v1018
          %v1038 = vmul.f32 %v1001, %v1018
          %v1039 = vmul.f32 %v1002, %v1018
          %v1040 = vmul.f32 %v1003, %v1018
          %v1041 = vmul.f32 %v1004, %v1018
          %v1042 = vmul.f32 %v1005, %v1018
          %v1043 = vmul.f32 %v1006, %v1018
          %v1044 = vmul.f32 %v1007, %v1018
          %v1045 = vmul.f32 %v1008, %v1018
          %v1046 = vmul.f32 %v1009, %v1018
          %v1047 = vmul.f32 %v1010, %v1018
          %v1048 = vmul.f32 %v1011, %v1018
          %v1049 = vmul.f32 %v1012, %v1018
          %v1050 = vmul.f32 %v1013, %v1018
          %v1051 = vld [vmem:[#allocation3 + $0x1] sm:$0x1]
          %v1052 = vlaneseq
          %v1053 = vshrl.u32 %v1052, 7
          %v1054 = vsub.s32 0, %v1053
          %v1055 = vrot.slane %v1051, %v1054
          %v1056 = vadd.f32 %v1019, %v1055
          %v1057 = vadd.f32 %v1020, %v1055
          %v1058 = vadd.f32 %v1021, %v1055
          %v1059 = vadd.f32 %v1022, %v1055
          %v1060 = vadd.f32 %v1023, %v1055
          %v1061 = vadd.f32 %v1024, %v1055
          %v1062 = vadd.f32 %v1025, %v1055
          %v1063 = vadd.f32 %v1026, %v1055
          %v1064 = vadd.f32 %v1027, %v1055
          %v1065 = vadd.f32 %v1028, %v1055
          %v1066 = vadd.f32 %v1029, %v1055
          %v1067 = vadd.f32 %v1030, %v1055
          %v1068 = vadd.f32 %v1031, %v1055
          %v1069 = vadd.f32 %v1032, %v1055
          %v1070 = vadd.f32 %v1033, %v1055
          %v1071 = vadd.f32 %v1034, %v1055
          %v1072 = vadd.f32 %v1035, %v1055
          %v1073 = vadd.f32 %v1036, %v1055
          %v1074 = vadd.f32 %v1037, %v1055
          %v1075 = vadd.f32 %v1038, %v1055
          %v1076 = vadd.f32 %v1039, %v1055
          %v1077 = vadd.f32 %v1040, %v1055
          %v1078 = vadd.f32 %v1041, %v1055
          %v1079 = vadd.f32 %v1042, %v1055
          %v1080 = vadd.f32 %v1043, %v1055
          %v1081 = vadd.f32 %v1044, %v1055
          %v1082 = vadd.f32 %v1045, %v1055
          %v1083 = vadd.f32 %v1046, %v1055
          %v1084 = vadd.f32 %v1047, %v1055
          %v1085 = vadd.f32 %v1048, %v1055
          %v1086 = vadd.f32 %v1049, %v1055
          %v1087 = vadd.f32 %v1050, %v1055
          %v1088 = vld [vmem:[#allocation3 + $0x2] sm:$0x1]
          %v1089 = vlaneseq
          %v1090 = vshrl.u32 %v1089, 7
          %v1091 = vsub.s32 0, %v1090
          %v1092 = vrot.slane %v1088, %v1091
          %v1093 = vmul.f32 %v458, %v1092
          %v1094 = vmul.f32 %v463, %v1092
          %v1095 = vmul.f32 %v468, %v1092
          %v1096 = vmul.f32 %v473, %v1092
          %v1097 = vmul.f32 %v478, %v1092
          %v1098 = vmul.f32 %v483, %v1092
          %v1099 = vmul.f32 %v488, %v1092
          %v1100 = vmul.f32 %v493, %v1092
          %v1101 = vmul.f32 %v498, %v1092
          %v1102 = vmul.f32 %v503, %v1092
          %v1103 = vmul.f32 %v508, %v1092
          %v1104 = vmul.f32 %v513, %v1092
          %v1105 = vmul.f32 %v518, %v1092
          %v1106 = vmul.f32 %v523, %v1092
          %v1107 = vmul.f32 %v528, %v1092
          %v1108 = vmul.f32 %v533, %v1092
          %v1109 = vmul.f32 %v538, %v1092
          %v1110 = vmul.f32 %v543, %v1092
          %v1111 = vmul.f32 %v548, %v1092
          %v1112 = vmul.f32 %v553, %v1092
          %v1113 = vmul.f32 %v558, %v1092
          %v1114 = vmul.f32 %v563, %v1092
          %v1115 = vmul.f32 %v568, %v1092
          %v1116 = vmul.f32 %v573, %v1092
          %v1117 = vmul.f32 %v578, %v1092
          %v1118 = vmul.f32 %v583, %v1092
          %v1119 = vmul.f32 %v588, %v1092
          %v1120 = vmul.f32 %v593, %v1092
          %v1121 = vmul.f32 %v598, %v1092
          %v1122 = vmul.f32 %v603, %v1092
          %v1123 = vmul.f32 %v608, %v1092
          %v1124 = vmul.f32 %v613, %v1092
          %v1125 = vadd.f32 %v1056, %v1093
          %v1126 = vadd.f32 %v1057, %v1094
          %v1127 = vadd.f32 %v1058, %v1095
          %v1128 = vadd.f32 %v1059, %v1096
          %v1129 = vadd.f32 %v1060, %v1097
          %v1130 = vadd.f32 %v1061, %v1098
          %v1131 = vadd.f32 %v1062, %v1099
          %v1132 = vadd.f32 %v1063, %v1100
          %v1133 = vadd.f32 %v1064, %v1101
          %v1134 = vadd.f32 %v1065, %v1102
          %v1135 = vadd.f32 %v1066, %v1103
          %v1136 = vadd.f32 %v1067, %v1104
          %v1137 = vadd.f32 %v1068, %v1105
          %v1138 = vadd.f32 %v1069, %v1106
          %v1139 = vadd.f32 %v1070, %v1107
          %v1140 = vadd.f32 %v1071, %v1108
          %v1141 = vadd.f32 %v1072, %v1109
          %v1142 = vadd.f32 %v1073, %v1110
          %v1143 = vadd.f32 %v1074, %v1111
          %v1144 = vadd.f32 %v1075, %v1112
          %v1145 = vadd.f32 %v1076, %v1113
          %v1146 = vadd.f32 %v1077, %v1114
          %v1147 = vadd.f32 %v1078, %v1115
          %v1148 = vadd.f32 %v1079, %v1116
          %v1149 = vadd.f32 %v1080, %v1117
          %v1150 = vadd.f32 %v1081, %v1118
          %v1151 = vadd.f32 %v1082, %v1119
          %v1152 = vadd.f32 %v1083, %v1120
          %v1153 = vadd.f32 %v1084, %v1121
          %v1154 = vadd.f32 %v1085, %v1122
          %v1155 = vadd.f32 %v1086, %v1123
          %v1156 = vadd.f32 %v1087, %v1124
          %v1157 = vld [vmem:[#allocation3 + $0x3] sm:$0x1]
          %v1158 = vlaneseq
          %v1159 = vshrl.u32 %v1158, 7
          %v1160 = vsub.s32 0, %v1159
          %v1161 = vrot.slane %v1157, %v1160
          %v1162 = vadd.f32 %v1125, %v1161
          %v1163 = vadd.f32 %v1126, %v1161
          %v1164 = vadd.f32 %v1127, %v1161
          %v1165 = vadd.f32 %v1128, %v1161
          %v1166 = vadd.f32 %v1129, %v1161
          %v1167 = vadd.f32 %v1130, %v1161
          %v1168 = vadd.f32 %v1131, %v1161
          %v1169 = vadd.f32 %v1132, %v1161
          %v1170 = vadd.f32 %v1133, %v1161
          %v1171 = vadd.f32 %v1134, %v1161
          %v1172 = vadd.f32 %v1135, %v1161
          %v1173 = vadd.f32 %v1136, %v1161
          %v1174 = vadd.f32 %v1137, %v1161
          %v1175 = vadd.f32 %v1138, %v1161
          %v1176 = vadd.f32 %v1139, %v1161
          %v1177 = vadd.f32 %v1140, %v1161
          %v1178 = vadd.f32 %v1141, %v1161
          %v1179 = vadd.f32 %v1142, %v1161
          %v1180 = vadd.f32 %v1143, %v1161
          %v1181 = vadd.f32 %v1144, %v1161
          %v1182 = vadd.f32 %v1145, %v1161
          %v1183 = vadd.f32 %v1146, %v1161
          %v1184 = vadd.f32 %v1147, %v1161
          %v1185 = vadd.f32 %v1148, %v1161
          %v1186 = vadd.f32 %v1149, %v1161
          %v1187 = vadd.f32 %v1150, %v1161
          %v1188 = vadd.f32 %v1151, %v1161
          %v1189 = vadd.f32 %v1152, %v1161
          %v1190 = vadd.f32 %v1153, %v1161
          %v1191 = vadd.f32 %v1154, %v1161
          %v1192 = vadd.f32 %v1155, %v1161
          %v1193 = vadd.f32 %v1156, %v1161
          %v1194 = vxor.u32 %v1162, 2147483648
          %v1195 = vxor.u32 %v1163, 2147483648
          %v1196 = vxor.u32 %v1164, 2147483648
          %v1197 = vxor.u32 %v1165, 2147483648
          %v1198 = vxor.u32 %v1166, 2147483648
          %v1199 = vxor.u32 %v1167, 2147483648
          %v1200 = vxor.u32 %v1168, 2147483648
          %v1201 = vxor.u32 %v1169, 2147483648
          %v1202 = vxor.u32 %v1170, 2147483648
          %v1203 = vxor.u32 %v1171, 2147483648
          %v1204 = vxor.u32 %v1172, 2147483648
          %v1205 = vxor.u32 %v1173, 2147483648
          %v1206 = vxor.u32 %v1174, 2147483648
          %v1207 = vxor.u32 %v1175, 2147483648
          %v1208 = vxor.u32 %v1176, 2147483648
          %v1209 = vxor.u32 %v1177, 2147483648
          %v1210 = vxor.u32 %v1178, 2147483648
          %v1211 = vxor.u32 %v1179, 2147483648
          %v1212 = vxor.u32 %v1180, 2147483648
          %v1213 = vxor.u32 %v1181, 2147483648
          %v1214 = vxor.u32 %v1182, 2147483648
          %v1215 = vxor.u32 %v1183, 2147483648
          %v1216 = vxor.u32 %v1184, 2147483648
          %v1217 = vxor.u32 %v1185, 2147483648
          %v1218 = vxor.u32 %v1186, 2147483648
          %v1219 = vxor.u32 %v1187, 2147483648
          %v1220 = vxor.u32 %v1188, 2147483648
          %v1221 = vxor.u32 %v1189, 2147483648
          %v1222 = vxor.u32 %v1190, 2147483648
          %v1223 = vxor.u32 %v1191, 2147483648
          %v1224 = vxor.u32 %v1192, 2147483648
          %v1225 = vxor.u32 %v1193, 2147483648
          %v1226 = vmul.f32 %v1194, 1.442695
          %v1227 = vpow.pop %v1226
          %v1228 = vmul.f32 %v1195, 1.442695
          %v1229 = vpow.pop %v1228
          %v1230 = vmul.f32 %v1196, 1.442695
          %v1231 = vpow.pop %v1230
          %v1232 = vmul.f32 %v1197, 1.442695
          %v1233 = vpow.pop %v1232
          %v1234 = vmul.f32 %v1198, 1.442695
          %v1235 = vpow.pop %v1234
          %v1236 = vmul.f32 %v1199, 1.442695
          %v1237 = vpow.pop %v1236
          %v1238 = vmul.f32 %v1200, 1.442695
          %v1239 = vpow.pop %v1238
          %v1240 = vmul.f32 %v1201, 1.442695
          %v1241 = vpow.pop %v1240
          %v1242 = vmul.f32 %v1202, 1.442695
          %v1243 = vpow.pop %v1242
          %v1244 = vmul.f32 %v1203, 1.442695
          %v1245 = vpow.pop %v1244
          %v1246 = vmul.f32 %v1204, 1.442695
          %v1247 = vpow.pop %v1246
          %v1248 = vmul.f32 %v1205, 1.442695
          %v1249 = vpow.pop %v1248
          %v1250 = vmul.f32 %v1206, 1.442695
          %v1251 = vpow.pop %v1250
          %v1252 = vmul.f32 %v1207, 1.442695
          %v1253 = vpow.pop %v1252
          %v1254 = vmul.f32 %v1208, 1.442695
          %v1255 = vpow.pop %v1254
          %v1256 = vmul.f32 %v1209, 1.442695
          %v1257 = vpow.pop %v1256
          %v1258 = vmul.f32 %v1210, 1.442695
          %v1259 = vpow.pop %v1258
          %v1260 = vmul.f32 %v1211, 1.442695
          %v1261 = vpow.pop %v1260
          %v1262 = vmul.f32 %v1212, 1.442695
          %v1263 = vpow.pop %v1262
          %v1264 = vmul.f32 %v1213, 1.442695
          %v1265 = vpow.pop %v1264
          %v1266 = vmul.f32 %v1214, 1.442695
          %v1267 = vpow.pop %v1266
          %v1268 = vmul.f32 %v1215, 1.442695
          %v1269 = vpow.pop %v1268
          %v1270 = vmul.f32 %v1216, 1.442695
          %v1271 = vpow.pop %v1270
          %v1272 = vmul.f32 %v1217, 1.442695
          %v1273 = vpow.pop %v1272
          %v1274 = vmul.f32 %v1218, 1.442695
          %v1275 = vpow.pop %v1274
          %v1276 = vmul.f32 %v1219, 1.442695
          %v1277 = vpow.pop %v1276
          %v1278 = vmul.f32 %v1220, 1.442695
          %v1279 = vpow.pop %v1278
          %v1280 = vmul.f32 %v1221, 1.442695
          %v1281 = vpow.pop %v1280
          %v1282 = vmul.f32 %v1222, 1.442695
          %v1283 = vpow.pop %v1282
          %v1284 = vmul.f32 %v1223, 1.442695
          %v1285 = vpow.pop %v1284
          %v1286 = vmul.f32 %v1224, 1.442695
          %v1287 = vpow.pop %v1286
          %v1288 = vmul.f32 %v1225, 1.442695
          %v1289 = vpow.pop %v1288
          %v1290 = vadd.f32 %v1227, 1.0
          %v1291 = vadd.f32 %v1229, 1.0
          %v1292 = vadd.f32 %v1231, 1.0
          %v1293 = vadd.f32 %v1233, 1.0
          %v1294 = vadd.f32 %v1235, 1.0
          %v1295 = vadd.f32 %v1237, 1.0
          %v1296 = vadd.f32 %v1239, 1.0
          %v1297 = vadd.f32 %v1241, 1.0
          %v1298 = vadd.f32 %v1243, 1.0
          %v1299 = vadd.f32 %v1245, 1.0
          %v1300 = vadd.f32 %v1247, 1.0
          %v1301 = vadd.f32 %v1249, 1.0
          %v1302 = vadd.f32 %v1251, 1.0
          %v1303 = vadd.f32 %v1253, 1.0
          %v1304 = vadd.f32 %v1255, 1.0
          %v1305 = vadd.f32 %v1257, 1.0
          %v1306 = vadd.f32 %v1259, 1.0
          %v1307 = vadd.f32 %v1261, 1.0
          %v1308 = vadd.f32 %v1263, 1.0
          %v1309 = vadd.f32 %v1265, 1.0
          %v1310 = vadd.f32 %v1267, 1.0
          %v1311 = vadd.f32 %v1269, 1.0
          %v1312 = vadd.f32 %v1271, 1.0
          %v1313 = vadd.f32 %v1273, 1.0
          %v1314 = vadd.f32 %v1275, 1.0
          %v1315 = vadd.f32 %v1277, 1.0
          %v1316 = vadd.f32 %v1279, 1.0
          %v1317 = vadd.f32 %v1281, 1.0
          %v1318 = vadd.f32 %v1283, 1.0
          %v1319 = vadd.f32 %v1285, 1.0
          %v1320 = vadd.f32 %v1287, 1.0
          %v1321 = vadd.f32 %v1289, 1.0
          %v1322 = vrcp.pop %v1290
          %v1323 = vmul.f32 1.0, %v1322
          %v1324 = vrcp.pop %v1291
          %v1325 = vmul.f32 1.0, %v1324
          %v1326 = vrcp.pop %v1292
          %v1327 = vmul.f32 1.0, %v1326
          %v1328 = vrcp.pop %v1293
          %v1329 = vmul.f32 1.0, %v1328
          %v1330 = vrcp.pop %v1294
          %v1331 = vmul.f32 1.0, %v1330
          %v1332 = vrcp.pop %v1295
          %v1333 = vmul.f32 1.0, %v1332
          %v1334 = vrcp.pop %v1296
          %v1335 = vmul.f32 1.0, %v1334
          %v1336 = vrcp.pop %v1297
          %v1337 = vmul.f32 1.0, %v1336
          %v1338 = vrcp.pop %v1298
          %v1339 = vmul.f32 1.0, %v1338
          %v1340 = vrcp.pop %v1299
          %v1341 = vmul.f32 1.0, %v1340
          %v1342 = vrcp.pop %v1300
          %v1343 = vmul.f32 1.0, %v1342
          %v1344 = vrcp.pop %v1301
          %v1345 = vmul.f32 1.0, %v1344
          %v1346 = vrcp.pop %v1302
          %v1347 = vmul.f32 1.0, %v1346
          %v1348 = vrcp.pop %v1303
          %v1349 = vmul.f32 1.0, %v1348
          %v1350 = vrcp.pop %v1304
          %v1351 = vmul.f32 1.0, %v1350
          %v1352 = vrcp.pop %v1305
          %v1353 = vmul.f32 1.0, %v1352
          %v1354 = vrcp.pop %v1306
          %v1355 = vmul.f32 1.0, %v1354
          %v1356 = vrcp.pop %v1307
          %v1357 = vmul.f32 1.0, %v1356
          %v1358 = vrcp.pop %v1308
          %v1359 = vmul.f32 1.0, %v1358
          %v1360 = vrcp.pop %v1309
          %v1361 = vmul.f32 1.0, %v1360
          %v1362 = vrcp.pop %v1310
          %v1363 = vmul.f32 1.0, %v1362
          %v1364 = vrcp.pop %v1311
          %v1365 = vmul.f32 1.0, %v1364
          %v1366 = vrcp.pop %v1312
          %v1367 = vmul.f32 1.0, %v1366
          %v1368 = vrcp.pop %v1313
          %v1369 = vmul.f32 1.0, %v1368
          %v1370 = vrcp.pop %v1314
          %v1371 = vmul.f32 1.0, %v1370
          %v1372 = vrcp.pop %v1315
          %v1373 = vmul.f32 1.0, %v1372
          %v1374 = vrcp.pop %v1316
          %v1375 = vmul.f32 1.0, %v1374
          %v1376 = vrcp.pop %v1317
          %v1377 = vmul.f32 1.0, %v1376
          %v1378 = vrcp.pop %v1318
          %v1379 = vmul.f32 1.0, %v1378
          %v1380 = vrcp.pop %v1319
          %v1381 = vmul.f32 1.0, %v1380
          %v1382 = vrcp.pop %v1320
          %v1383 = vmul.f32 1.0, %v1382
          %v1384 = vrcp.pop %v1321
          %v1385 = vmul.f32 1.0, %v1384
          %v1386 = vmul.f32 %v950, %v1323
          %v1387 = vmul.f32 %v951, %v1325
          %v1388 = vmul.f32 %v952, %v1327
          %v1389 = vmul.f32 %v953, %v1329
          %v1390 = vmul.f32 %v954, %v1331
          %v1391 = vmul.f32 %v955, %v1333
          %v1392 = vmul.f32 %v956, %v1335
          %v1393 = vmul.f32 %v957, %v1337
          %v1394 = vmul.f32 %v958, %v1339
          %v1395 = vmul.f32 %v959, %v1341
          %v1396 = vmul.f32 %v960, %v1343
          %v1397 = vmul.f32 %v961, %v1345
          %v1398 = vmul.f32 %v962, %v1347
          %v1399 = vmul.f32 %v963, %v1349
          %v1400 = vmul.f32 %v964, %v1351
          %v1401 = vmul.f32 %v965, %v1353
          %v1402 = vmul.f32 %v966, %v1355
          %v1403 = vmul.f32 %v967, %v1357
          %v1404 = vmul.f32 %v968, %v1359
          %v1405 = vmul.f32 %v969, %v1361
          %v1406 = vmul.f32 %v970, %v1363
          %v1407 = vmul.f32 %v971, %v1365
          %v1408 = vmul.f32 %v972, %v1367
          %v1409 = vmul.f32 %v973, %v1369
          %v1410 = vmul.f32 %v974, %v1371
          %v1411 = vmul.f32 %v975, %v1373
          %v1412 = vmul.f32 %v976, %v1375
          %v1413 = vmul.f32 %v977, %v1377
          %v1414 = vmul.f32 %v978, %v1379
          %v1415 = vmul.f32 %v979, %v1381
          %v1416 = vmul.f32 %v980, %v1383
          %v1417 = vmul.f32 %v981, %v1385
          %v1418 = vmul.f32 %v1386, %v1386
          %v1419 = vmul.f32 %v1387, %v1387
          %v1420 = vmul.f32 %v1388, %v1388
          %v1421 = vmul.f32 %v1389, %v1389
          %v1422 = vmul.f32 %v1390, %v1390
          %v1423 = vmul.f32 %v1391, %v1391
          %v1424 = vmul.f32 %v1392, %v1392
          %v1425 = vmul.f32 %v1393, %v1393
          %v1426 = vmul.f32 %v1394, %v1394
          %v1427 = vmul.f32 %v1395, %v1395
          %v1428 = vmul.f32 %v1396, %v1396
          %v1429 = vmul.f32 %v1397, %v1397
          %v1430 = vmul.f32 %v1398, %v1398
          %v1431 = vmul.f32 %v1399, %v1399
          %v1432 = vmul.f32 %v1400, %v1400
          %v1433 = vmul.f32 %v1401, %v1401
          %v1434 = vmul.f32 %v1402, %v1402
          %v1435 = vmul.f32 %v1403, %v1403
          %v1436 = vmul.f32 %v1404, %v1404
          %v1437 = vmul.f32 %v1405, %v1405
          %v1438 = vmul.f32 %v1406, %v1406
          %v1439 = vmul.f32 %v1407, %v1407
          %v1440 = vmul.f32 %v1408, %v1408
          %v1441 = vmul.f32 %v1409, %v1409
          %v1442 = vmul.f32 %v1410, %v1410
          %v1443 = vmul.f32 %v1411, %v1411
          %v1444 = vmul.f32 %v1412, %v1412
          %v1445 = vmul.f32 %v1413, %v1413
          %v1446 = vmul.f32 %v1414, %v1414
          %v1447 = vmul.f32 %v1415, %v1415
          %v1448 = vmul.f32 %v1416, %v1416
          %v1449 = vmul.f32 %v1417, %v1417
          %1450 = vadd.xlane.f32.xlu0 %v1418
          %v1451 = vpop.xlane.xlu0 %1450
          %1452 = vadd.xlane.f32.xlu0 %v1419
          %v1453 = vpop.xlane.xlu0 %1452
          %1454 = vadd.xlane.f32.xlu0 %v1420
          %v1455 = vpop.xlane.xlu0 %1454
          %1456 = vadd.xlane.f32.xlu0 %v1421
          %v1457 = vpop.xlane.xlu0 %1456
          %1458 = vadd.xlane.f32.xlu0 %v1422
          %v1459 = vpop.xlane.xlu0 %1458
          %1460 = vadd.xlane.f32.xlu0 %v1423
          %v1461 = vpop.xlane.xlu0 %1460
          %1462 = vadd.xlane.f32.xlu0 %v1424
          %v1463 = vpop.xlane.xlu0 %1462
          %1464 = vadd.xlane.f32.xlu0 %v1425
          %v1465 = vpop.xlane.xlu0 %1464
          %1466 = vadd.xlane.f32.xlu0 %v1426
          %v1467 = vpop.xlane.xlu0 %1466
          %1468 = vadd.xlane.f32.xlu0 %v1427
          %v1469 = vpop.xlane.xlu0 %1468
          %1470 = vadd.xlane.f32.xlu0 %v1428
          %v1471 = vpop.xlane.xlu0 %1470
          %1472 = vadd.xlane.f32.xlu0 %v1429
          %v1473 = vpop.xlane.xlu0 %1472
          %1474 = vadd.xlane.f32.xlu0 %v1430
          %v1475 = vpop.xlane.xlu0 %1474
          %1476 = vadd.xlane.f32.xlu0 %v1431
          %v1477 = vpop.xlane.xlu0 %1476
          %1478 = vadd.xlane.f32.xlu0 %v1432
          %v1479 = vpop.xlane.xlu0 %1478
          %1480 = vadd.xlane.f32.xlu0 %v1433
          %v1481 = vpop.xlane.xlu0 %1480
          %1482 = vadd.xlane.f32.xlu0 %v1434
          %v1483 = vpop.xlane.xlu0 %1482
          %1484 = vadd.xlane.f32.xlu0 %v1435
          %v1485 = vpop.xlane.xlu0 %1484
          %1486 = vadd.xlane.f32.xlu0 %v1436
          %v1487 = vpop.xlane.xlu0 %1486
          %1488 = vadd.xlane.f32.xlu0 %v1437
          %v1489 = vpop.xlane.xlu0 %1488
          %1490 = vadd.xlane.f32.xlu0 %v1438
          %v1491 = vpop.xlane.xlu0 %1490
          %1492 = vadd.xlane.f32.xlu0 %v1439
          %v1493 = vpop.xlane.xlu0 %1492
          %1494 = vadd.xlane.f32.xlu0 %v1440
          %v1495 = vpop.xlane.xlu0 %1494
          %1496 = vadd.xlane.f32.xlu0 %v1441
          %v1497 = vpop.xlane.xlu0 %1496
          %1498 = vadd.xlane.f32.xlu0 %v1442
          %v1499 = vpop.xlane.xlu0 %1498
          %1500 = vadd.xlane.f32.xlu0 %v1443
          %v1501 = vpop.xlane.xlu0 %1500
          %1502 = vadd.xlane.f32.xlu0 %v1444
          %v1503 = vpop.xlane.xlu0 %1502
          %1504 = vadd.xlane.f32.xlu0 %v1445
          %v1505 = vpop.xlane.xlu0 %1504
          %1506 = vadd.xlane.f32.xlu0 %v1446
          %v1507 = vpop.xlane.xlu0 %1506
          %1508 = vadd.xlane.f32.xlu0 %v1447
          %v1509 = vpop.xlane.xlu0 %1508
          %1510 = vadd.xlane.f32.xlu0 %v1448
          %v1511 = vpop.xlane.xlu0 %1510
          %1512 = vadd.xlane.f32.xlu0 %v1449
          %v1513 = vpop.xlane.xlu0 %1512
          %v1514 = vmax.f32 %v1451, 1e-24
          %v1515 = vmax.f32 %v1453, 1e-24
          %v1516 = vmax.f32 %v1455, 1e-24
          %v1517 = vmax.f32 %v1457, 1e-24
          %v1518 = vmax.f32 %v1459, 1e-24
          %v1519 = vmax.f32 %v1461, 1e-24
          %v1520 = vmax.f32 %v1463, 1e-24
          %v1521 = vmax.f32 %v1465, 1e-24
          %v1522 = vmax.f32 %v1467, 1e-24
          %v1523 = vmax.f32 %v1469, 1e-24
          %v1524 = vmax.f32 %v1471, 1e-24
          %v1525 = vmax.f32 %v1473, 1e-24
          %v1526 = vmax.f32 %v1475, 1e-24
          %v1527 = vmax.f32 %v1477, 1e-24
          %v1528 = vmax.f32 %v1479, 1e-24
          %v1529 = vmax.f32 %v1481, 1e-24
          %v1530 = vmax.f32 %v1483, 1e-24
          %v1531 = vmax.f32 %v1485, 1e-24
          %v1532 = vmax.f32 %v1487, 1e-24
          %v1533 = vmax.f32 %v1489, 1e-24
          %v1534 = vmax.f32 %v1491, 1e-24
          %v1535 = vmax.f32 %v1493, 1e-24
          %v1536 = vmax.f32 %v1495, 1e-24
          %v1537 = vmax.f32 %v1497, 1e-24
          %v1538 = vmax.f32 %v1499, 1e-24
          %v1539 = vmax.f32 %v1501, 1e-24
          %v1540 = vmax.f32 %v1503, 1e-24
          %v1541 = vmax.f32 %v1505, 1e-24
          %v1542 = vmax.f32 %v1507, 1e-24
          %v1543 = vmax.f32 %v1509, 1e-24
          %v1544 = vmax.f32 %v1511, 1e-24
          %v1545 = vmax.f32 %v1513, 1e-24
          %v1546 = vrsqrt.pop %v1514
          %v1547 = vrsqrt.pop %v1515
          %v1548 = vrsqrt.pop %v1516
          %v1549 = vrsqrt.pop %v1517
          %v1550 = vrsqrt.pop %v1518
          %v1551 = vrsqrt.pop %v1519
          %v1552 = vrsqrt.pop %v1520
          %v1553 = vrsqrt.pop %v1521
          %v1554 = vrsqrt.pop %v1522
          %v1555 = vrsqrt.pop %v1523
          %v1556 = vrsqrt.pop %v1524
          %v1557 = vrsqrt.pop %v1525
          %v1558 = vrsqrt.pop %v1526
          %v1559 = vrsqrt.pop %v1527
          %v1560 = vrsqrt.pop %v1528
          %v1561 = vrsqrt.pop %v1529
          %v1562 = vrsqrt.pop %v1530
          %v1563 = vrsqrt.pop %v1531
          %v1564 = vrsqrt.pop %v1532
          %v1565 = vrsqrt.pop %v1533
          %v1566 = vrsqrt.pop %v1534
          %v1567 = vrsqrt.pop %v1535
          %v1568 = vrsqrt.pop %v1536
          %v1569 = vrsqrt.pop %v1537
          %v1570 = vrsqrt.pop %v1538
          %v1571 = vrsqrt.pop %v1539
          %v1572 = vrsqrt.pop %v1540
          %v1573 = vrsqrt.pop %v1541
          %v1574 = vrsqrt.pop %v1542
          %v1575 = vrsqrt.pop %v1543
          %v1576 = vrsqrt.pop %v1544
          %v1577 = vrsqrt.pop %v1545
          %v1578 = vmul.f32 %v1386, %v1546
          %v1579 = vmul.f32 %v1387, %v1547
          %v1580 = vmul.f32 %v1388, %v1548
          %v1581 = vmul.f32 %v1389, %v1549
          %v1582 = vmul.f32 %v1390, %v1550
          %v1583 = vmul.f32 %v1391, %v1551
          %v1584 = vmul.f32 %v1392, %v1552
          %v1585 = vmul.f32 %v1393, %v1553
          %v1586 = vmul.f32 %v1394, %v1554
          %v1587 = vmul.f32 %v1395, %v1555
          %v1588 = vmul.f32 %v1396, %v1556
          %v1589 = vmul.f32 %v1397, %v1557
          %v1590 = vmul.f32 %v1398, %v1558
          %v1591 = vmul.f32 %v1399, %v1559
          %v1592 = vmul.f32 %v1400, %v1560
          %v1593 = vmul.f32 %v1401, %v1561
          %v1594 = vmul.f32 %v1402, %v1562
          %v1595 = vmul.f32 %v1403, %v1563
          %v1596 = vmul.f32 %v1404, %v1564
          %v1597 = vmul.f32 %v1405, %v1565
          %v1598 = vmul.f32 %v1406, %v1566
          %v1599 = vmul.f32 %v1407, %v1567
          %v1600 = vmul.f32 %v1408, %v1568
          %v1601 = vmul.f32 %v1409, %v1569
          %v1602 = vmul.f32 %v1410, %v1570
          %v1603 = vmul.f32 %v1411, %v1571
          %v1604 = vmul.f32 %v1412, %v1572
          %v1605 = vmul.f32 %v1413, %v1573
          %v1606 = vmul.f32 %v1414, %v1574
          %v1607 = vmul.f32 %v1415, %v1575
          %v1608 = vmul.f32 %v1416, %v1576
          %v1609 = vmul.f32 %v1417, %v1577
          %1610 = vst [vmem:[#allocation7] sm:$0xff] %v1578
          %1611 = vst [vmem:[#allocation7 + $0x8] sm:$0xff] %v1579
          %1612 = vst [vmem:[#allocation7 + $0x10] sm:$0xff] %v1580
          %1613 = vst [vmem:[#allocation7 + $0x18] sm:$0xff] %v1581
          %1614 = vst [vmem:[#allocation7 + $0x20] sm:$0xff] %v1582
          %1615 = vst [vmem:[#allocation7 + $0x28] sm:$0xff] %v1583
          %1616 = vst [vmem:[#allocation7 + $0x30] sm:$0xff] %v1584
          %1617 = vst [vmem:[#allocation7 + $0x38] sm:$0xff] %v1585
          %1618 = vst [vmem:[#allocation7 + $0x40] sm:$0xff] %v1586
          %1619 = vst [vmem:[#allocation7 + $0x48] sm:$0xff] %v1587
          %1620 = vst [vmem:[#allocation7 + $0x50] sm:$0xff] %v1588
          %1621 = vst [vmem:[#allocation7 + $0x58] sm:$0xff] %v1589
          %1622 = vst [vmem:[#allocation7 + $0x60] sm:$0xff] %v1590
          %1623 = vst [vmem:[#allocation7 + $0x68] sm:$0xff] %v1591
          %1624 = vst [vmem:[#allocation7 + $0x70] sm:$0xff] %v1592
          %1625 = vst [vmem:[#allocation7 + $0x78] sm:$0xff] %v1593
          %1626 = vst [vmem:[#allocation7 + $0x80] sm:$0xff] %v1594
          %1627 = vst [vmem:[#allocation7 + $0x88] sm:$0xff] %v1595
          %1628 = vst [vmem:[#allocation7 + $0x90] sm:$0xff] %v1596
          %1629 = vst [vmem:[#allocation7 + $0x98] sm:$0xff] %v1597
          %1630 = vst [vmem:[#allocation7 + $0xa0] sm:$0xff] %v1598
          %1631 = vst [vmem:[#allocation7 + $0xa8] sm:$0xff] %v1599
          %1632 = vst [vmem:[#allocation7 + $0xb0] sm:$0xff] %v1600
          %1633 = vst [vmem:[#allocation7 + $0xb8] sm:$0xff] %v1601
          %1634 = vst [vmem:[#allocation7 + $0xc0] sm:$0xff] %v1602
          %1635 = vst [vmem:[#allocation7 + $0xc8] sm:$0xff] %v1603
          %1636 = vst [vmem:[#allocation7 + $0xd0] sm:$0xff] %v1604
          %1637 = vst [vmem:[#allocation7 + $0xd8] sm:$0xff] %v1605
          %1638 = vst [vmem:[#allocation7 + $0xe0] sm:$0xff] %v1606
          %1639 = vst [vmem:[#allocation7 + $0xe8] sm:$0xff] %v1607
          %1640 = vst [vmem:[#allocation7 + $0xf0] sm:$0xff] %v1608
          %1641 = vst [vmem:[#allocation7 + $0xf8] sm:$0xff] %v1609
        $region72: #{gated_embedding_unit_reasoning.1} parent=51 // pred_fallthru
          _
        // Predicated region
        $region73: #{gated_embedding_unit_reasoning.1} parent=51 // pred_check
          %p1642 = pneg %p229
        $region74: #{gated_embedding_unit_reasoning.1} parent=51 // pred_check_branch
          %1644 = sbr.rel (%p1642) target = $region76
        $region75: #{gated_embedding_unit_reasoning.1} parent=51 // pred_region
          %s1645 = smul.u32 32, %s26
          %s1647 = ssub.s32 4096, 4096
          %1648 = vsyncadd [#allocation6], %s1647
          %s1649 = smul.addr %s1645, 128
          %s1650 = scalar_lea.hbm %s8, %s1649
          %s1651 = sshll.u32 [#allocation7], 4
          %s1652 = int_to_ptr.vmem [resolvable:$true] %s1651
          %1657 = dma.vmem_to_hbm [thread:$0]  %s1652, 4096, %s1650, [#allocation6], 128, 128, 8
        $region76: #{gated_embedding_unit_reasoning.1} parent=51 // pred_fallthru
          _
        // Predicated region
        $region77: #{gated_embedding_unit_reasoning.1} parent=51 // pred_check
          %p1658 = pneg %p229
        $region78: #{gated_embedding_unit_reasoning.1} parent=51 // pred_check_branch
          %1660 = sbr.rel (%p1658) target = $region80
        $region79: #{gated_embedding_unit_reasoning.1} parent=51 // pred_region
          %1661 = dma.done [#allocation6], 4096
        $region80: #{gated_embedding_unit_reasoning.1} parent=51 // pred_fallthru
          _
      $region52: #{gated_embedding_unit_reasoning.1} parent=5 // pred_fallthru
        _
      %p1662 = scmp.le.s32.totalorder 2, %s16
      // Predicated region
      $region81: #{gated_embedding_unit_reasoning.1} parent=5 // pred_check
        %p1663 = pneg %p1662
      $region82: #{gated_embedding_unit_reasoning.1} parent=5 // pred_check_branch
        %1665 = sbr.rel (%p1663) target = $region84
      $region83: #{gated_embedding_unit_reasoning.1} parent=5 // pred_region
        %s1666 = ssub.s32 %s16, 2
      $region84: #{gated_embedding_unit_reasoning.1} parent=5 // pred_fallthru
        _
    $region6: #{gated_embedding_unit_reasoning.1} parent=1 // loop_footer
      %s20 = sadd.s32 1, %s16
    $region7: #{gated_embedding_unit_reasoning.1} parent=1 // loop_footer_branch
      %15 = sbr.rel target = $region3
    $region8: #{gated_embedding_unit_reasoning.1} parent=1 // loop_exit
      _
    %1667 = vsyncpa [#allocation5], 1
    %s1668 = scalar_lea.sflag [#allocation5], 1
    %1669 = vsyncpa %s1668, 1
    %1670 = vsyncpa [#allocation6], 1
    %s1671 = scalar_lea.sflag [#allocation6], 1
    %1672 = vsyncpa %s1671, 1

</llo_original>
